<compile_context>
chip_gen: v7x
topology: tpu7x:2x2x1
jax: 0.10.0
libtpu: 0.0.40
codegen_flags: <defaults>
</compile_context>

<pallas_src>
import jax
import jax.numpy as jnp
from jax.experimental import pallas as pl
from jax.experimental.pallas import tpu as pltpu


def _round_up(x, m):
    return (x + m - 1) // m * m


def _cdiv(a, b):
    return -(-a // b)


def _qnet_kernel(x_ref,
                 w1_ref, b1_ref,
                 w2_ref, b2_ref,
                 w3_ref, b3_ref,
                 w4_ref, b4_ref,
                 w5_ref, b5_ref,
                 out_ref):
    # Activations in bf16 for the MXU, f32 accumulation, biases/softmax in f32.
    h = x_ref[...].astype(jnp.bfloat16)

    # fc1..fc4 + ReLU
    h = jnp.dot(h, w1_ref[...], preferred_element_type=jnp.float32) + b1_ref[...]
    h = jnp.maximum(h, 0.0).astype(jnp.bfloat16)
    h = jnp.dot(h, w2_ref[...], preferred_element_type=jnp.float32) + b2_ref[...]
    h = jnp.maximum(h, 0.0).astype(jnp.bfloat16)
    h = jnp.dot(h, w3_ref[...], preferred_element_type=jnp.float32) + b3_ref[...]
    h = jnp.maximum(h, 0.0).astype(jnp.bfloat16)
    h = jnp.dot(h, w4_ref[...], preferred_element_type=jnp.float32) + b4_ref[...]
    h = jnp.maximum(h, 0.0).astype(jnp.bfloat16)

    # fc5 + softmax over the (padded, lane-dense) action dim.
    # Padded columns carry a -1e30 bias (f32) -> exp() == 0 exactly, so softmax
    # over the real columns is unchanged (PyTorch F.softmax on 2-D input == dim=1).
    logits = jnp.dot(h, w5_ref[...], preferred_element_type=jnp.float32) + b5_ref[...]
    m = jnp.max(logits, axis=-1, keepdims=True)
    e = jnp.exp(logits - m)
    denom = jnp.sum(e, axis=-1, keepdims=True)
    # Exact f32 reciprocal: rows sum to 1 to f32 precision (approx=True was too loose).
    out_ref[...] = e / denom


def _choose_batch_tile(B):
    """Pick a batch tile: big tiles at large B (fewer grid steps), >=2 steps for
    moderate B (v7x megacore), and <~10% padding waste at awkward sizes."""
    TB_MAX = 512
    if B <= 256:
        n_blocks = 1
    elif B <= 2 * TB_MAX:
        n_blocks = 2
    else:
        n_blocks = _cdiv(B, TB_MAX)
    return _round_up(_cdiv(B, n_blocks), 8)


@jax.jit
def qnetwork_forward(x, params):
    """x: [B, state_size] f32. params: flat tuple (w1, b1, ..., w5, b5) in f32,
    weights stored [in, out] (transposed vs. PyTorch), biases [1, out]."""
    B, state_size = x.shape
    action_size = params[-1].shape[-1]

    w1, b1, w2, b2, w3, b3, w4, b4, w5, b5 = params

    # ---- wrapper-side prep: zero-padding for lane/sublane alignment ----
    # fc1 K dim: state_size -> multiple of 128 (lane-dense x, aligned MXU operand).
    pad_s = _round_up(state_size, 128)
    w1p = jnp.pad(w1, ((0, pad_s - state_size), (0, 0)))

    # fc4 out / fc5 in: 64 -> 128 (lane-dense h; padded h cols are ReLU(0)=0 and
    # the matching padded w5 rows are 0, so logits are unchanged).
    h4 = w4.shape[-1]
    pad_h4 = _round_up(h4, 128)
    w4p = jnp.pad(w4, ((0, 0), (0, pad_h4 - h4)))
    b4p = jnp.pad(b4, ((0, 0), (0, pad_h4 - h4)))
    w5r = jnp.pad(w5, ((0, pad_h4 - h4), (0, 0)))

    # Action dim: pad to 128 lanes; padded logits get -1e30 bias -> zero softmax mass.
    pad_a = _round_up(action_size, 128)
    w5p = jnp.pad(w5r, ((0, 0), (0, pad_a - action_size)))
    b5p = jnp.pad(b5, ((0, 0), (0, pad_a - action_size)), constant_values=-1e30)

    ws = [w.astype(jnp.bfloat16) for w in (w1p, w2, w3, w4p, w5p)]
    bs = [b.astype(jnp.float32) for b in (b1, b2, b3, b4p, b5p)]

    # Batch tiling.
    tb = _choose_batch_tile(B)
    bp = _round_up(B, tb)
    xp = jnp.pad(x.astype(jnp.float32), ((0, bp - B), (0, pad_s - state_size)))

    grid = (bp // tb,)

    def resident(shape):
        # Full-array block, same block index every batch step -> fetched once, reused.
        return pl.BlockSpec(shape, lambda i: (0,) * len(shape))

    flat_params = []
    param_specs = []
    for w, b in zip(ws, bs):
        flat_params += [w, b]
        param_specs += [resident(w.shape), resident(b.shape)]

    out_padded = pl.pallas_call(
        _qnet_kernel,
        out_shape=jax.ShapeDtypeStruct((bp, pad_a), jnp.float32),
        grid=grid,
        in_specs=[pl.BlockSpec((tb, pad_s), lambda i: (i, 0))] + param_specs,
        out_specs=pl.BlockSpec((tb, pad_a), lambda i: (i, 0)),
        compiler_params=pltpu.CompilerParams(
            dimension_semantics=("parallel",)),
    )(xp, *flat_params)

    return out_padded[:B, :action_size]


def init_params(state_size, action_size, seed=0):
    """Deterministic init mimicking nn.Linear default (U(-1/sqrt(in), 1/sqrt(in))).
    Weights stored as [in, out] (transposed vs. PyTorch's [out, in])."""
    key = jax.random.PRNGKey(seed)
    dims = [state_size, 512, 512, 128, 64, action_size]
    params = []
    for i in range(5):
        fan_in, fan_out = dims[i], dims[i + 1]
        key, kw, kb = jax.random.split(key, 3)
        bound = 1.0 / (fan_in ** 0.5)
        w = jax.random.uniform(kw, (fan_in, fan_out), jnp.float32, -bound, bound)
        b = jax.random.uniform(kb, (1, fan_out), jnp.float32, -bound, bound)
        params.extend([w, b])
    return tuple(params)


def _reference_forward(x, params):
    """Pure-JAX reference with the same bf16-weight / f32-accumulate numerics."""
    w1, b1, w2, b2, w3, b3, w4, b4, w5, b5 = params
    h = x
    for w, b in ((w1, b1), (w2, b2), (w3, b3), (w4, b4)):
        h = jnp.maximum(
            jnp.dot(h.astype(jnp.bfloat16), w.astype(jnp.bfloat16),
                    preferred_element_type=jnp.float32) + b, 0.0)
    logits = jnp.dot(h.astype(jnp.bfloat16), w5.astype(jnp.bfloat16),
                     preferred_element_type=jnp.float32) + b5
    return jax.nn.softmax(logits, axis=-1)


if __name__ == "__main__":
    state_size = 26   # turtlebot3-style laser scan + goal features
    action_size = 5
    batch = 8

    key = jax.random.PRNGKey(0)
    x = jax.random.normal(key, (batch, state_size), dtype=jnp.float32)

    params = init_params(state_size, action_size, seed=0)

    out = qnetwork_forward(x, params)
    out = jax.block_until_ready(out)

    # Sanity checks: shape, softmax rows sum to 1, matches JAX reference.
    assert out.shape == (batch, action_size)
    assert jnp.allclose(jnp.sum(out, axis=-1), 1.0, atol=1e-4), \
        float(jnp.max(jnp.abs(jnp.sum(out, axis=-1) - 1.0)))
    ref = _reference_forward(x, params)
    assert jnp.allclose(out, ref, atol=3e-2), float(jnp.max(jnp.abs(out - ref)))

    print("KERNEL_OK")
</pallas_src>

<mosaic_0001>
module attributes {stable_mosaic.version = 11 : i64} {
  func.func @_qnet_kernel(%arg0: i32, %arg1: memref<8x128xf32, #tpu.memory_space<vmem>>, %arg2: memref<128x512xbf16, #tpu.memory_space<vmem>>, %arg3: memref<1x512xf32, #tpu.memory_space<vmem>>, %arg4: memref<512x512xbf16, #tpu.memory_space<vmem>>, %arg5: memref<1x512xf32, #tpu.memory_space<vmem>>, %arg6: memref<512x128xbf16, #tpu.memory_space<vmem>>, %arg7: memref<1x128xf32, #tpu.memory_space<vmem>>, %arg8: memref<128x128xbf16, #tpu.memory_space<vmem>>, %arg9: memref<1x128xf32, #tpu.memory_space<vmem>>, %arg10: memref<128x128xbf16, #tpu.memory_space<vmem>>, %arg11: memref<1x128xf32, #tpu.memory_space<vmem>>, %arg12: memref<8x128xf32, #tpu.memory_space<vmem>>) attributes {dimension_semantics = [#tpu.dimension_semantics<parallel>], iteration_bounds = array<i64: 1>, scalar_prefetch = 0 : i64, scratch_operands = 0 : i64, tpu.core_type = #tpu.core_type<tc>, window_params = [{transform_indices = @transform_0, window_bounds = array<i64: 8, 128>}, {pipeline_mode = #tpu.pipeline_mode<synchronous>, transform_indices = @transform_1, window_bounds = array<i64: 128, 512>}, {pipeline_mode = #tpu.pipeline_mode<synchronous>, transform_indices = @transform_2, window_bounds = array<i64: 1, 512>}, {pipeline_mode = #tpu.pipeline_mode<synchronous>, transform_indices = @transform_3, window_bounds = array<i64: 512, 512>}, {pipeline_mode = #tpu.pipeline_mode<synchronous>, transform_indices = @transform_4, window_bounds = array<i64: 1, 512>}, {pipeline_mode = #tpu.pipeline_mode<synchronous>, transform_indices = @transform_5, window_bounds = array<i64: 512, 128>}, {pipeline_mode = #tpu.pipeline_mode<synchronous>, transform_indices = @transform_6, window_bounds = array<i64: 1, 128>}, {pipeline_mode = #tpu.pipeline_mode<synchronous>, transform_indices = @transform_7, window_bounds = array<i64: 128, 128>}, {pipeline_mode = #tpu.pipeline_mode<synchronous>, transform_indices = @transform_8, window_bounds = array<i64: 1, 128>}, {pipeline_mode = #tpu.pipeline_mode<synchronous>, transform_indices = @transform_9, window_bounds = array<i64: 128, 128>}, {pipeline_mode = #tpu.pipeline_mode<synchronous>, transform_indices = @transform_10, window_bounds = array<i64: 1, 128>}, {transform_indices = @transform_11, window_bounds = array<i64: 8, 128>}]} {
    %c0 = arith.constant 0 : index
    %c0_0 = arith.constant 0 : index
    %0 = vector.load %arg1[%c0, %c0_0] : memref<8x128xf32, #tpu.memory_space<vmem>>, vector<8x128xf32>
    %1 = arith.truncf %0 : vector<8x128xf32> to vector<8x128xbf16>
    %c0_1 = arith.constant 0 : index
    %c0_2 = arith.constant 0 : index
    %2 = vector.load %arg2[%c0_1, %c0_2] : memref<128x512xbf16, #tpu.memory_space<vmem>>, vector<128x512xbf16>
    %cst = arith.constant dense<0.000000e+00> : vector<8x512xf32>
    %3 = tpu.matmul %1, %2, %cst {dimension_numbers = #tpu.dot_dimension_numbers<[1], [0], [0], [1], [0, 0, 1, 1], [], []>} : vector<8x128xbf16>, vector<128x512xbf16>, vector<8x512xf32> -> vector<8x512xf32>
    %c0_3 = arith.constant 0 : index
    %c0_4 = arith.constant 0 : index
    %4 = vector.load %arg3[%c0_3, %c0_4] : memref<1x512xf32, #tpu.memory_space<vmem>>, vector<1x512xf32>
    %5 = vector.broadcast %4 : vector<1x512xf32> to vector<8x512xf32>
    %6 = arith.addf %3, %5 : vector<8x512xf32>
    %cst_5 = arith.constant 0.000000e+00 : f32
    %7 = vector.broadcast %cst_5 : f32 to vector<8x512xf32>
    %8 = arith.maximumf %6, %7 : vector<8x512xf32>
    %9 = arith.truncf %8 : vector<8x512xf32> to vector<8x512xbf16>
    %c0_6 = arith.constant 0 : index
    %c0_7 = arith.constant 0 : index
    %10 = vector.load %arg4[%c0_6, %c0_7] : memref<512x512xbf16, #tpu.memory_space<vmem>>, vector<512x512xbf16>
    %cst_8 = arith.constant dense<0.000000e+00> : vector<8x512xf32>
    %11 = tpu.matmul %9, %10, %cst_8 {dimension_numbers = #tpu.dot_dimension_numbers<[1], [0], [0], [1], [0, 0, 1, 1], [], []>} : vector<8x512xbf16>, vector<512x512xbf16>, vector<8x512xf32> -> vector<8x512xf32>
    %c0_9 = arith.constant 0 : index
    %c0_10 = arith.constant 0 : index
    %12 = vector.load %arg5[%c0_9, %c0_10] : memref<1x512xf32, #tpu.memory_space<vmem>>, vector<1x512xf32>
    %13 = vector.broadcast %12 : vector<1x512xf32> to vector<8x512xf32>
    %14 = arith.addf %11, %13 : vector<8x512xf32>
    %cst_11 = arith.constant 0.000000e+00 : f32
    %15 = vector.broadcast %cst_11 : f32 to vector<8x512xf32>
    %16 = arith.maximumf %14, %15 : vector<8x512xf32>
    %17 = arith.truncf %16 : vector<8x512xf32> to vector<8x512xbf16>
    %c0_12 = arith.constant 0 : index
    %c0_13 = arith.constant 0 : index
    %18 = vector.load %arg6[%c0_12, %c0_13] : memref<512x128xbf16, #tpu.memory_space<vmem>>, vector<512x128xbf16>
    %cst_14 = arith.constant dense<0.000000e+00> : vector<8x128xf32>
    %19 = tpu.matmul %17, %18, %cst_14 {dimension_numbers = #tpu.dot_dimension_numbers<[1], [0], [0], [1], [0, 0, 1, 1], [], []>} : vector<8x512xbf16>, vector<512x128xbf16>, vector<8x128xf32> -> vector<8x128xf32>
    %c0_15 = arith.constant 0 : index
    %c0_16 = arith.constant 0 : index
    %20 = vector.load %arg7[%c0_15, %c0_16] : memref<1x128xf32, #tpu.memory_space<vmem>>, vector<1x128xf32>
    %21 = vector.broadcast %20 : vector<1x128xf32> to vector<8x128xf32>
    %22 = arith.addf %19, %21 : vector<8x128xf32>
    %cst_17 = arith.constant 0.000000e+00 : f32
    %23 = vector.broadcast %cst_17 : f32 to vector<8x128xf32>
    %24 = arith.maximumf %22, %23 : vector<8x128xf32>
    %25 = arith.truncf %24 : vector<8x128xf32> to vector<8x128xbf16>
    %c0_18 = arith.constant 0 : index
    %c0_19 = arith.constant 0 : index
    %26 = vector.load %arg8[%c0_18, %c0_19] : memref<128x128xbf16, #tpu.memory_space<vmem>>, vector<128x128xbf16>
    %cst_20 = arith.constant dense<0.000000e+00> : vector<8x128xf32>
    %27 = tpu.matmul %25, %26, %cst_20 {dimension_numbers = #tpu.dot_dimension_numbers<[1], [0], [0], [1], [0, 0, 1, 1], [], []>} : vector<8x128xbf16>, vector<128x128xbf16>, vector<8x128xf32> -> vector<8x128xf32>
    %c0_21 = arith.constant 0 : index
    %c0_22 = arith.constant 0 : index
    %28 = vector.load %arg9[%c0_21, %c0_22] : memref<1x128xf32, #tpu.memory_space<vmem>>, vector<1x128xf32>
    %29 = vector.broadcast %28 : vector<1x128xf32> to vector<8x128xf32>
    %30 = arith.addf %27, %29 : vector<8x128xf32>
    %cst_23 = arith.constant 0.000000e+00 : f32
    %31 = vector.broadcast %cst_23 : f32 to vector<8x128xf32>
    %32 = arith.maximumf %30, %31 : vector<8x128xf32>
    %33 = arith.truncf %32 : vector<8x128xf32> to vector<8x128xbf16>
    %c0_24 = arith.constant 0 : index
    %c0_25 = arith.constant 0 : index
    %34 = vector.load %arg10[%c0_24, %c0_25] : memref<128x128xbf16, #tpu.memory_space<vmem>>, vector<128x128xbf16>
    %cst_26 = arith.constant dense<0.000000e+00> : vector<8x128xf32>
    %35 = tpu.matmul %33, %34, %cst_26 {dimension_numbers = #tpu.dot_dimension_numbers<[1], [0], [0], [1], [0, 0, 1, 1], [], []>} : vector<8x128xbf16>, vector<128x128xbf16>, vector<8x128xf32> -> vector<8x128xf32>
    %c0_27 = arith.constant 0 : index
    %c0_28 = arith.constant 0 : index
    %36 = vector.load %arg11[%c0_27, %c0_28] : memref<1x128xf32, #tpu.memory_space<vmem>>, vector<1x128xf32>
    %37 = vector.broadcast %36 : vector<1x128xf32> to vector<8x128xf32>
    %38 = arith.addf %35, %37 : vector<8x128xf32>
    %cst_29 = arith.constant dense<0xFF800000> : vector<8xf32>
    %39 = vector.multi_reduction <maximumf>, %38, %cst_29 [1] : vector<8x128xf32> to vector<8xf32>
    %40 = vector.shape_cast %39 : vector<8xf32> to vector<8x1xf32>
    %41 = vector.broadcast %40 : vector<8x1xf32> to vector<8x128xf32>
    %42 = arith.subf %38, %41 : vector<8x128xf32>
    %43 = math.exp %42 : vector<8x128xf32>
    %cst_30 = arith.constant dense<0.000000e+00> : vector<8xf32>
    %44 = vector.multi_reduction <add>, %43, %cst_30 [1] : vector<8x128xf32> to vector<8xf32>
    %45 = vector.shape_cast %44 : vector<8xf32> to vector<8x1xf32>
    %46 = vector.broadcast %45 : vector<8x1xf32> to vector<8x128xf32>
    %47 = arith.divf %43, %46 : vector<8x128xf32>
    %c0_31 = arith.constant 0 : index
    %c0_32 = arith.constant 0 : index
    %48 = vector.load %arg12[%c0_31, %c0_32] : memref<8x128xf32, #tpu.memory_space<vmem>>, vector<8x128xf32>
    tpu.vector_store %arg12[%c0_31, %c0_32], %47 {strides = array<i32>} : memref<8x128xf32, #tpu.memory_space<vmem>>, vector<8x128xf32>,
    return
  }
  func.func @transform_0(%arg0: i32) -> (i32, i32) {
    %c0_i32 = arith.constant 0 : i32
    %c0_i32_0 = arith.constant 0 : i32
    return %arg0, %c0_i32 : i32, i32
  }
  func.func @transform_1(%arg0: i32) -> (i32, i32) {
    %c0_i32 = arith.constant 0 : i32
    %c0_i32_0 = arith.constant 0 : i32
    %c0_i32_1 = arith.constant 0 : i32
    return %c0_i32, %c0_i32_0 : i32, i32
  }
  func.func @transform_2(%arg0: i32) -> (i32, i32) {
    %c0_i32 = arith.constant 0 : i32
    %c0_i32_0 = arith.constant 0 : i32
    %c0_i32_1 = arith.constant 0 : i32
    return %c0_i32, %c0_i32_0 : i32, i32
  }
  func.func @transform_3(%arg0: i32) -> (i32, i32) {
    %c0_i32 = arith.constant 0 : i32
    %c0_i32_0 = arith.constant 0 : i32
    %c0_i32_1 = arith.constant 0 : i32
    return %c0_i32, %c0_i32_0 : i32, i32
  }
  func.func @transform_4(%arg0: i32) -> (i32, i32) {
    %c0_i32 = arith.constant 0 : i32
    %c0_i32_0 = arith.constant 0 : i32
    %c0_i32_1 = arith.constant 0 : i32
    return %c0_i32, %c0_i32_0 : i32, i32
  }
  func.func @transform_5(%arg0: i32) -> (i32, i32) {
    %c0_i32 = arith.constant 0 : i32
    %c0_i32_0 = arith.constant 0 : i32
    %c0_i32_1 = arith.constant 0 : i32
    return %c0_i32, %c0_i32_0 : i32, i32
  }
  func.func @transform_6(%arg0: i32) -> (i32, i32) {
    %c0_i32 = arith.constant 0 : i32
    %c0_i32_0 = arith.constant 0 : i32
    %c0_i32_1 = arith.constant 0 : i32
    return %c0_i32, %c0_i32_0 : i32, i32
  }
  func.func @transform_7(%arg0: i32) -> (i32, i32) {
    %c0_i32 = arith.constant 0 : i32
    %c0_i32_0 = arith.constant 0 : i32
    %c0_i32_1 = arith.constant 0 : i32
    return %c0_i32, %c0_i32_0 : i32, i32
  }
  func.func @transform_8(%arg0: i32) -> (i32, i32) {
    %c0_i32 = arith.constant 0 : i32
    %c0_i32_0 = arith.constant 0 : i32
    %c0_i32_1 = arith.constant 0 : i32
    return %c0_i32, %c0_i32_0 : i32, i32
  }
  func.func @transform_9(%arg0: i32) -> (i32, i32) {
    %c0_i32 = arith.constant 0 : i32
    %c0_i32_0 = arith.constant 0 : i32
    %c0_i32_1 = arith.constant 0 : i32
    return %c0_i32, %c0_i32_0 : i32, i32
  }
  func.func @transform_10(%arg0: i32) -> (i32, i32) {
    %c0_i32 = arith.constant 0 : i32
    %c0_i32_0 = arith.constant 0 : i32
    %c0_i32_1 = arith.constant 0 : i32
    return %c0_i32, %c0_i32_0 : i32, i32
  }
  func.func @transform_11(%arg0: i32) -> (i32, i32) {
    %c0_i32 = arith.constant 0 : i32
    %c0_i32_0 = arith.constant 0 : i32
    return %arg0, %c0_i32 : i32, i32
  }
}

</mosaic_0001>

<llo_original>
// kernel: qnetwork_forward.1
$region0: #{qnetwork_forward.1}
  #allocation0 [shape = 'u32[]', space=smem, size = 0x4, offset = 0x4, fixed_abs, tag = 'smem constant byte address 0x4 - core index']
  #allocation1 [shape = 'u32[144,128]{1,0:T(1,128)}', space=vmem, size = 0x12000, scoped, tag = 'internal scratch']
  %s0 = inlined_call_operand.vmem [shape: f32[8,128], index: 0, kind: input, shape index: {}]
  %s1 = inlined_call_operand.vmem [shape: bf16[128,512], index: 1, kind: input, shape index: {}]
  %s2 = inlined_call_operand.vmem [shape: f32[1,512], index: 2, kind: input, shape index: {}]
  %s3 = inlined_call_operand.vmem [shape: bf16[512,512], index: 3, kind: input, shape index: {}]
  %s4 = inlined_call_operand.vmem [shape: f32[1,512], index: 4, kind: input, shape index: {}]
  %s5 = inlined_call_operand.vmem [shape: bf16[512,128], index: 5, kind: input, shape index: {}]
  %s6 = inlined_call_operand.vmem [shape: f32[1,128], index: 6, kind: input, shape index: {}]
  %s7 = inlined_call_operand.vmem [shape: bf16[128,128], index: 7, kind: input, shape index: {}]
  %s8 = inlined_call_operand.vmem [shape: f32[1,128], index: 8, kind: input, shape index: {}]
  %s9 = inlined_call_operand.vmem [shape: bf16[128,128], index: 9, kind: input, shape index: {}]
  %s10 = inlined_call_operand.vmem [shape: f32[1,128], index: 10, kind: input, shape index: {}]
  %s11 = inlined_call_operand.hbm [shape: f32[8,128], index: 11, kind: output, shape index: {}]
  %s12 = sld [smem:[#allocation0]]
  $region54: #{qnetwork_forward.1} parent=0
    _
  %s14 = ssub.s32 1, %s12
  %s15 = scalar_select 0, %s14, %s12
  $region1: #{qnetwork_forward.1} parent=0
    #allocation2 [shape = 'u8[4096]{0}', space=vmem, size = 0x1000, scoped, tag = 'output window, operand 0, single buffered']
    #allocation3 [shape = 's32[1]{0}', space=sflag, size = 0x4, scoped, tag = 'scoped memory for qnetwork_forward.1']
    %16 = vsyncpa [#allocation3], 0
    // Predicated region
    $region2: #{qnetwork_forward.1} parent=1 // pred_check
      _
    $region3: #{qnetwork_forward.1} parent=1 // pred_check_branch
      %18 = sbr.rel (0) target = $region5
    $region4: #{qnetwork_forward.1} parent=1 // pred_region
      _
    $region5: #{qnetwork_forward.1} parent=1 // pred_fallthru
      _
    // Predicated region
    $region6: #{qnetwork_forward.1} parent=1 // pred_check
      _
    $region7: #{qnetwork_forward.1} parent=1 // pred_check_branch
      %20 = sbr.rel (0) target = $region9
    $region8: #{qnetwork_forward.1} parent=1 // pred_region
      _
    $region9: #{qnetwork_forward.1} parent=1 // pred_fallthru
      _
    // Predicated region
    $region10: #{qnetwork_forward.1} parent=1 // pred_check
      _
    $region11: #{qnetwork_forward.1} parent=1 // pred_check_branch
      %22 = sbr.rel (0) target = $region13
    $region12: #{qnetwork_forward.1} parent=1 // pred_region
      _
    $region13: #{qnetwork_forward.1} parent=1 // pred_fallthru
      _
    // Predicated region
    $region14: #{qnetwork_forward.1} parent=1 // pred_check
      _
    $region15: #{qnetwork_forward.1} parent=1 // pred_check_branch
      %24 = sbr.rel (0) target = $region17
    $region16: #{qnetwork_forward.1} parent=1 // pred_region
      _
    $region17: #{qnetwork_forward.1} parent=1 // pred_fallthru
      _
    // Predicated region
    $region18: #{qnetwork_forward.1} parent=1 // pred_check
      _
    $region19: #{qnetwork_forward.1} parent=1 // pred_check_branch
      %26 = sbr.rel (0) target = $region21
    $region20: #{qnetwork_forward.1} parent=1 // pred_region
      _
    $region21: #{qnetwork_forward.1} parent=1 // pred_fallthru
      _
    // Predicated region
    $region22: #{qnetwork_forward.1} parent=1 // pred_check
      _
    $region23: #{qnetwork_forward.1} parent=1 // pred_check_branch
      %28 = sbr.rel (0) target = $region25
    $region24: #{qnetwork_forward.1} parent=1 // pred_region
      _
    $region25: #{qnetwork_forward.1} parent=1 // pred_fallthru
      _
    // Predicated region
    $region26: #{qnetwork_forward.1} parent=1 // pred_check
      _
    $region27: #{qnetwork_forward.1} parent=1 // pred_check_branch
      %30 = sbr.rel (0) target = $region29
    $region28: #{qnetwork_forward.1} parent=1 // pred_region
      _
    $region29: #{qnetwork_forward.1} parent=1 // pred_fallthru
      _
    // Predicated region
    $region30: #{qnetwork_forward.1} parent=1 // pred_check
      _
    $region31: #{qnetwork_forward.1} parent=1 // pred_check_branch
      %32 = sbr.rel (0) target = $region33
    $region32: #{qnetwork_forward.1} parent=1 // pred_region
      _
    $region33: #{qnetwork_forward.1} parent=1 // pred_fallthru
      _
    // Predicated region
    $region34: #{qnetwork_forward.1} parent=1 // pred_check
      _
    $region35: #{qnetwork_forward.1} parent=1 // pred_check_branch
      %34 = sbr.rel (0) target = $region37
    $region36: #{qnetwork_forward.1} parent=1 // pred_region
      _
    $region37: #{qnetwork_forward.1} parent=1 // pred_fallthru
      _
    // Predicated region
    $region38: #{qnetwork_forward.1} parent=1 // pred_check
      _
    $region39: #{qnetwork_forward.1} parent=1 // pred_check_branch
      %36 = sbr.rel (0) target = $region41
    $region40: #{qnetwork_forward.1} parent=1 // pred_region
      _
    $region41: #{qnetwork_forward.1} parent=1 // pred_fallthru
      _
    // Predicated region
    $region42: #{qnetwork_forward.1} parent=1 // pred_check
      _
    $region43: #{qnetwork_forward.1} parent=1 // pred_check_branch
      %38 = sbr.rel (0) target = $region45
    $region44: #{qnetwork_forward.1} parent=1 // pred_region
      _
    $region45: #{qnetwork_forward.1} parent=1 // pred_fallthru
      _
    %v40 = vld [vmem:[%s0] sm:$0xff]
    %v41 = vpack.c.bf16 %v40, %v40
    %v42 = vld [vmem:[%s1] sm:$0xff]
    %v43 = vld [vmem:[%s1 + $0x8] sm:$0xff]
    %v44 = vld [vmem:[%s1 + $0x10] sm:$0xff]
    %v45 = vld [vmem:[%s1 + $0x18] sm:$0xff]
    %v46 = vld [vmem:[%s1 + $0x20] sm:$0xff]
    %v47 = vld [vmem:[%s1 + $0x28] sm:$0xff]
    %v48 = vld [vmem:[%s1 + $0x30] sm:$0xff]
    %v49 = vld [vmem:[%s1 + $0x38] sm:$0xff]
    %v50 = vld [vmem:[%s1 + $0x40] sm:$0xff]
    %v51 = vld [vmem:[%s1 + $0x48] sm:$0xff]
    %v52 = vld [vmem:[%s1 + $0x50] sm:$0xff]
    %v53 = vld [vmem:[%s1 + $0x58] sm:$0xff]
    %v54 = vld [vmem:[%s1 + $0x60] sm:$0xff]
    %v55 = vld [vmem:[%s1 + $0x68] sm:$0xff]
    %v56 = vld [vmem:[%s1 + $0x70] sm:$0xff]
    %v57 = vld [vmem:[%s1 + $0x78] sm:$0xff]
    %v58 = vld [vmem:[%s1 + $0x80] sm:$0xff]
    %v59 = vld [vmem:[%s1 + $0x88] sm:$0xff]
    %v60 = vld [vmem:[%s1 + $0x90] sm:$0xff]
    %v61 = vld [vmem:[%s1 + $0x98] sm:$0xff]
    %v62 = vld [vmem:[%s1 + $0xa0] sm:$0xff]
    %v63 = vld [vmem:[%s1 + $0xa8] sm:$0xff]
    %v64 = vld [vmem:[%s1 + $0xb0] sm:$0xff]
    %v65 = vld [vmem:[%s1 + $0xb8] sm:$0xff]
    %v66 = vld [vmem:[%s1 + $0xc0] sm:$0xff]
    %v67 = vld [vmem:[%s1 + $0xc8] sm:$0xff]
    %v68 = vld [vmem:[%s1 + $0xd0] sm:$0xff]
    %v69 = vld [vmem:[%s1 + $0xd8] sm:$0xff]
    %v70 = vld [vmem:[%s1 + $0xe0] sm:$0xff]
    %v71 = vld [vmem:[%s1 + $0xe8] sm:$0xff]
    %v72 = vld [vmem:[%s1 + $0xf0] sm:$0xff]
    %v73 = vld [vmem:[%s1 + $0xf8] sm:$0xff]
    %v74 = vld [vmem:[%s2] sm:$0xf]
    %v76 = vlaneseq
    %v77 = vshrl.u32 %v76, 7
    %v78 = vsub.s32 0, %v77
    %v79 = vrot.slane %v74, %v78
    %v80 = vlaneseq
    %v81 = vshrl.u32 %v80, 7
    %v82 = vsub.s32 1, %v81
    %v83 = vrot.slane %v74, %v82
    %v84 = vlaneseq
    %v85 = vshrl.u32 %v84, 7
    %v86 = vsub.s32 2, %v85
    %v87 = vrot.slane %v74, %v86
    %v88 = vlaneseq
    %v89 = vshrl.u32 %v88, 7
    %v90 = vsub.s32 3, %v89
    %v91 = vrot.slane %v74, %v90
    %v128 = vunpack.c.l.b16 %v42
    %v129 = vunpack.c.h.b16 %v42
    %v130 = vunpack.c.l.b16 %v43
    %v131 = vunpack.c.h.b16 %v43
    %v132 = vunpack.c.l.b16 %v44
    %v133 = vunpack.c.h.b16 %v44
    %v134 = vunpack.c.l.b16 %v45
    %v135 = vunpack.c.h.b16 %v45
    %v136 = vunpack.c.l.b16 %v46
    %v137 = vunpack.c.h.b16 %v46
    %v138 = vunpack.c.l.b16 %v47
    %v139 = vunpack.c.h.b16 %v47
    %v140 = vunpack.c.l.b16 %v48
    %v141 = vunpack.c.h.b16 %v48
    %v142 = vunpack.c.l.b16 %v49
    %v143 = vunpack.c.h.b16 %v49
    %v144 = vunpack.c.l.b16 %v50
    %v145 = vunpack.c.h.b16 %v50
    %v146 = vunpack.c.l.b16 %v51
    %v147 = vunpack.c.h.b16 %v51
    %v148 = vunpack.c.l.b16 %v52
    %v149 = vunpack.c.h.b16 %v52
    %v150 = vunpack.c.l.b16 %v53
    %v151 = vunpack.c.h.b16 %v53
    %v152 = vunpack.c.l.b16 %v54
    %v153 = vunpack.c.h.b16 %v54
    %v154 = vunpack.c.l.b16 %v55
    %v155 = vunpack.c.h.b16 %v55
    %v156 = vunpack.c.l.b16 %v56
    %v157 = vunpack.c.h.b16 %v56
    %v158 = vunpack.c.l.b16 %v57
    %v159 = vunpack.c.h.b16 %v57
    %v160 = vunpack.c.l.b16 %v58
    %v161 = vunpack.c.h.b16 %v58
    %v162 = vunpack.c.l.b16 %v59
    %v163 = vunpack.c.h.b16 %v59
    %v164 = vunpack.c.l.b16 %v60
    %v165 = vunpack.c.h.b16 %v60
    %v166 = vunpack.c.l.b16 %v61
    %v167 = vunpack.c.h.b16 %v61
    %v168 = vunpack.c.l.b16 %v62
    %v169 = vunpack.c.h.b16 %v62
    %v170 = vunpack.c.l.b16 %v63
    %v171 = vunpack.c.h.b16 %v63
    %v172 = vunpack.c.l.b16 %v64
    %v173 = vunpack.c.h.b16 %v64
    %v174 = vunpack.c.l.b16 %v65
    %v175 = vunpack.c.h.b16 %v65
    %v176 = vunpack.c.l.b16 %v66
    %v177 = vunpack.c.h.b16 %v66
    %v178 = vunpack.c.l.b16 %v67
    %v179 = vunpack.c.h.b16 %v67
    %v180 = vunpack.c.l.b16 %v68
    %v181 = vunpack.c.h.b16 %v68
    %v182 = vunpack.c.l.b16 %v69
    %v183 = vunpack.c.h.b16 %v69
    %v184 = vunpack.c.l.b16 %v70
    %v185 = vunpack.c.h.b16 %v70
    %v186 = vunpack.c.l.b16 %v71
    %v187 = vunpack.c.h.b16 %v71
    %v188 = vunpack.c.l.b16 %v72
    %v189 = vunpack.c.h.b16 %v72
    %v190 = vunpack.c.l.b16 %v73
    %v191 = vunpack.c.h.b16 %v73
    %v192 = vpack.c.b16 %v132, %v128
    %v193 = vpack.c.b16 %v133, %v129
    %v194 = vpack.c.b16 %v134, %v130
    %v195 = vpack.c.b16 %v135, %v131
    %v196 = vpack.c.b16 %v140, %v136
    %v197 = vpack.c.b16 %v141, %v137
    %v198 = vpack.c.b16 %v142, %v138
    %v199 = vpack.c.b16 %v143, %v139
    %v200 = vpack.c.b16 %v148, %v144
    %v201 = vpack.c.b16 %v149, %v145
    %v202 = vpack.c.b16 %v150, %v146
    %v203 = vpack.c.b16 %v151, %v147
    %v204 = vpack.c.b16 %v156, %v152
    %v205 = vpack.c.b16 %v157, %v153
    %v206 = vpack.c.b16 %v158, %v154
    %v207 = vpack.c.b16 %v159, %v155
    %v208 = vpack.c.b16 %v164, %v160
    %v209 = vpack.c.b16 %v165, %v161
    %v210 = vpack.c.b16 %v166, %v162
    %v211 = vpack.c.b16 %v167, %v163
    %v212 = vpack.c.b16 %v172, %v168
    %v213 = vpack.c.b16 %v173, %v169
    %v214 = vpack.c.b16 %v174, %v170
    %v215 = vpack.c.b16 %v175, %v171
    %v216 = vpack.c.b16 %v180, %v176
    %v217 = vpack.c.b16 %v181, %v177
    %v218 = vpack.c.b16 %v182, %v178
    %v219 = vpack.c.b16 %v183, %v179
    %v220 = vpack.c.b16 %v188, %v184
    %v221 = vpack.c.b16 %v189, %v185
    %v222 = vpack.c.b16 %v190, %v186
    %v223 = vpack.c.b16 %v191, %v187
    %256 = vmatprep.subr.bf16.mxu0 %v193
    %257 = vmatpush1.bf16.msra.mxu0 %v192
    %258 = vmatprep.subr.bf16.mxu0 %v197
    %259 = vmatpush1.bf16.msra.mxu0 %v196
    %260 = vmatprep.subr.bf16.mxu0 %v201
    %261 = vmatpush1.bf16.msra.mxu0 %v200
    %262 = vmatprep.subr.bf16.mxu0 %v205
    %263 = vmatpush1.bf16.msra.mxu0 %v204
    %264 = vmatprep.subr.bf16.mxu0 %v209
    %265 = vmatpush1.bf16.msra.mxu0 %v208
    %266 = vmatprep.subr.bf16.mxu0 %v213
    %267 = vmatpush1.bf16.msra.mxu0 %v212
    %268 = vmatprep.subr.bf16.mxu0 %v217
    %269 = vmatpush1.bf16.msra.mxu0 %v216
    %270 = vmatprep.subr.bf16.mxu0 %v221
    %271 = vmatpush1.bf16.msra.mxu0 %v220
    %272 = vmatprep.subr.bf16.mxu0 0
    %273 = vmatpush1.bf16.msra.mxu0 0
    %274 = vmatprep.subr.bf16.mxu0 0
    %275 = vmatpush1.bf16.msra.mxu0 0
    %276 = vmatprep.subr.bf16.mxu0 0
    %277 = vmatpush1.bf16.msra.mxu0 0
    %278 = vmatprep.subr.bf16.mxu0 0
    %279 = vmatpush1.bf16.msra.mxu0 0
    %280 = vmatprep.subr.bf16.mxu0 0
    %281 = vmatpush1.bf16.msra.mxu0 0
    %282 = vmatprep.subr.bf16.mxu0 0
    %283 = vmatpush1.bf16.msra.mxu0 0
    %284 = vmatprep.subr.bf16.mxu0 0
    %285 = vmatpush1.bf16.msra.mxu0 0
    %286 = vmatprep.subr.bf16.mxu0 0
    %287 = vmatpush1.bf16.msra.mxu0 0
    %288 = vmatprep.mubr.bf16.mxu0 0
    %289 = vmatmul.mubr.bf16.gmra.mrb[0].mxu0 %v41
    %v290 = vpop.f32.mrb[0].mxu0
    %v291 = vadd.f32 %v79, %v290
    %v292 = vpop.f32.mrb[0].mxu0
    %v293 = vadd.f32 %v83, %v292
    %v294 = vpop.f32.mrb[0].mxu0
    %v295 = vpop.f32.mrb[0].mxu0
    %296 = vdwg.mxu0
    %297 = vmatprep.subr.bf16.mxu0 %v195
    %298 = vmatpush1.bf16.msra.mxu0 %v194
    %299 = vmatprep.subr.bf16.mxu0 %v199
    %300 = vmatpush1.bf16.msra.mxu0 %v198
    %301 = vmatprep.subr.bf16.mxu0 %v203
    %302 = vmatpush1.bf16.msra.mxu0 %v202
    %303 = vmatprep.subr.bf16.mxu0 %v207
    %304 = vmatpush1.bf16.msra.mxu0 %v206
    %305 = vmatprep.subr.bf16.mxu0 %v211
    %306 = vmatpush1.bf16.msra.mxu0 %v210
    %307 = vmatprep.subr.bf16.mxu0 %v215
    %308 = vmatpush1.bf16.msra.mxu0 %v214
    %309 = vmatprep.subr.bf16.mxu0 %v219
    %310 = vmatpush1.bf16.msra.mxu0 %v218
    %311 = vmatprep.subr.bf16.mxu0 %v223
    %312 = vmatpush1.bf16.msra.mxu0 %v222
    %313 = vmatprep.subr.bf16.mxu0 0
    %314 = vmatpush1.bf16.msra.mxu0 0
    %315 = vmatprep.subr.bf16.mxu0 0
    %316 = vmatpush1.bf16.msra.mxu0 0
    %317 = vmatprep.subr.bf16.mxu0 0
    %318 = vmatpush1.bf16.msra.mxu0 0
    %319 = vmatprep.subr.bf16.mxu0 0
    %320 = vmatpush1.bf16.msra.mxu0 0
    %321 = vmatprep.subr.bf16.mxu0 0
    %322 = vmatpush1.bf16.msra.mxu0 0
    %323 = vmatprep.subr.bf16.mxu0 0
    %324 = vmatpush1.bf16.msra.mxu0 0
    %325 = vmatprep.subr.bf16.mxu0 0
    %326 = vmatpush1.bf16.msra.mxu0 0
    %327 = vmatprep.subr.bf16.mxu0 0
    %328 = vmatpush1.bf16.msra.mxu0 0
    %329 = vmatprep.mubr.bf16.mxu0 0
    %330 = vmatmul.mubr.bf16.gmra.mrb[0].mxu0 %v41
    %v331 = vpop.f32.mrb[0].mxu0
    %v332 = vadd.f32 %v87, %v331
    %v333 = vpop.f32.mrb[0].mxu0
    %v334 = vadd.f32 %v91, %v333
    %v335 = vpop.f32.mrb[0].mxu0
    %v336 = vpop.f32.mrb[0].mxu0
    %337 = vdwg.mxu0
    %v338 = vmax.f32 %v291, 0.0
    %v339 = vmax.f32 %v293, 0.0
    %v340 = vmax.f32 %v332, 0.0
    %v341 = vmax.f32 %v334, 0.0
    %v342 = vpack.c.bf16 %v338, %v338
    %v343 = vpack.c.bf16 %v339, %v339
    %v344 = vpack.c.bf16 %v340, %v340
    %v345 = vpack.c.bf16 %v341, %v341
    %v346 = vld [vmem:[%s3] sm:$0xff]
    %v347 = vld [vmem:[%s3 + $0x8] sm:$0xff]
    %v348 = vld [vmem:[%s3 + $0x10] sm:$0xff]
    %v349 = vld [vmem:[%s3 + $0x18] sm:$0xff]
    %v350 = vld [vmem:[%s3 + $0x20] sm:$0xff]
    %v351 = vld [vmem:[%s3 + $0x28] sm:$0xff]
    %v352 = vld [vmem:[%s3 + $0x30] sm:$0xff]
    %v353 = vld [vmem:[%s3 + $0x38] sm:$0xff]
    %v354 = vld [vmem:[%s3 + $0x40] sm:$0xff]
    %v355 = vld [vmem:[%s3 + $0x48] sm:$0xff]
    %v356 = vld [vmem:[%s3 + $0x50] sm:$0xff]
    %v357 = vld [vmem:[%s3 + $0x58] sm:$0xff]
    %v358 = vld [vmem:[%s3 + $0x60] sm:$0xff]
    %v359 = vld [vmem:[%s3 + $0x68] sm:$0xff]
    %v360 = vld [vmem:[%s3 + $0x70] sm:$0xff]
    %v361 = vld [vmem:[%s3 + $0x78] sm:$0xff]
    %v362 = vld [vmem:[%s3 + $0x80] sm:$0xff]
    %v363 = vld [vmem:[%s3 + $0x88] sm:$0xff]
    %v364 = vld [vmem:[%s3 + $0x90] sm:$0xff]
    %v365 = vld [vmem:[%s3 + $0x98] sm:$0xff]
    %v366 = vld [vmem:[%s3 + $0xa0] sm:$0xff]
    %v367 = vld [vmem:[%s3 + $0xa8] sm:$0xff]
    %v368 = vld [vmem:[%s3 + $0xb0] sm:$0xff]
    %v369 = vld [vmem:[%s3 + $0xb8] sm:$0xff]
    %v370 = vld [vmem:[%s3 + $0xc0] sm:$0xff]
    %v371 = vld [vmem:[%s3 + $0xc8] sm:$0xff]
    %v372 = vld [vmem:[%s3 + $0xd0] sm:$0xff]
    %v373 = vld [vmem:[%s3 + $0xd8] sm:$0xff]
    %v374 = vld [vmem:[%s3 + $0xe0] sm:$0xff]
    %v375 = vld [vmem:[%s3 + $0xe8] sm:$0xff]
    %v376 = vld [vmem:[%s3 + $0xf0] sm:$0xff]
    %v377 = vld [vmem:[%s3 + $0xf8] sm:$0xff]
    %v378 = vld [vmem:[%s3 + $0x100] sm:$0xff]
    %v379 = vld [vmem:[%s3 + $0x108] sm:$0xff]
    %v380 = vld [vmem:[%s3 + $0x110] sm:$0xff]
    %v381 = vld [vmem:[%s3 + $0x118] sm:$0xff]
    %v382 = vld [vmem:[%s3 + $0x120] sm:$0xff]
    %v383 = vld [vmem:[%s3 + $0x128] sm:$0xff]
    %v384 = vld [vmem:[%s3 + $0x130] sm:$0xff]
    %v385 = vld [vmem:[%s3 + $0x138] sm:$0xff]
    %v386 = vld [vmem:[%s3 + $0x140] sm:$0xff]
    %v387 = vld [vmem:[%s3 + $0x148] sm:$0xff]
    %v388 = vld [vmem:[%s3 + $0x150] sm:$0xff]
    %v389 = vld [vmem:[%s3 + $0x158] sm:$0xff]
    %v390 = vld [vmem:[%s3 + $0x160] sm:$0xff]
    %v391 = vld [vmem:[%s3 + $0x168] sm:$0xff]
    %v392 = vld [vmem:[%s3 + $0x170] sm:$0xff]
    %v393 = vld [vmem:[%s3 + $0x178] sm:$0xff]
    %v394 = vld [vmem:[%s3 + $0x180] sm:$0xff]
    %v395 = vld [vmem:[%s3 + $0x188] sm:$0xff]
    %v396 = vld [vmem:[%s3 + $0x190] sm:$0xff]
    %v397 = vld [vmem:[%s3 + $0x198] sm:$0xff]
    %v398 = vld [vmem:[%s3 + $0x1a0] sm:$0xff]
    %v399 = vld [vmem:[%s3 + $0x1a8] sm:$0xff]
    %v400 = vld [vmem:[%s3 + $0x1b0] sm:$0xff]
    %v401 = vld [vmem:[%s3 + $0x1b8] sm:$0xff]
    %v402 = vld [vmem:[%s3 + $0x1c0] sm:$0xff]
    %v403 = vld [vmem:[%s3 + $0x1c8] sm:$0xff]
    %v404 = vld [vmem:[%s3 + $0x1d0] sm:$0xff]
    %v405 = vld [vmem:[%s3 + $0x1d8] sm:$0xff]
    %v406 = vld [vmem:[%s3 + $0x1e0] sm:$0xff]
    %v407 = vld [vmem:[%s3 + $0x1e8] sm:$0xff]
    %v408 = vld [vmem:[%s3 + $0x1f0] sm:$0xff]
    %v409 = vld [vmem:[%s3 + $0x1f8] sm:$0xff]
    %v410 = vld [vmem:[%s3 + $0x200] sm:$0xff]
    %v411 = vld [vmem:[%s3 + $0x208] sm:$0xff]
    %v412 = vld [vmem:[%s3 + $0x210] sm:$0xff]
    %v413 = vld [vmem:[%s3 + $0x218] sm:$0xff]
    %v414 = vld [vmem:[%s3 + $0x220] sm:$0xff]
    %v415 = vld [vmem:[%s3 + $0x228] sm:$0xff]
    %v416 = vld [vmem:[%s3 + $0x230] sm:$0xff]
    %v417 = vld [vmem:[%s3 + $0x238] sm:$0xff]
    %v418 = vld [vmem:[%s3 + $0x240] sm:$0xff]
    %v419 = vld [vmem:[%s3 + $0x248] sm:$0xff]
    %v420 = vld [vmem:[%s3 + $0x250] sm:$0xff]
    %v421 = vld [vmem:[%s3 + $0x258] sm:$0xff]
    %v422 = vld [vmem:[%s3 + $0x260] sm:$0xff]
    %v423 = vld [vmem:[%s3 + $0x268] sm:$0xff]
    %v424 = vld [vmem:[%s3 + $0x270] sm:$0xff]
    %v425 = vld [vmem:[%s3 + $0x278] sm:$0xff]
    %v426 = vld [vmem:[%s3 + $0x280] sm:$0xff]
    %v427 = vld [vmem:[%s3 + $0x288] sm:$0xff]
    %v428 = vld [vmem:[%s3 + $0x290] sm:$0xff]
    %v429 = vld [vmem:[%s3 + $0x298] sm:$0xff]
    %v430 = vld [vmem:[%s3 + $0x2a0] sm:$0xff]
    %v431 = vld [vmem:[%s3 + $0x2a8] sm:$0xff]
    %v432 = vld [vmem:[%s3 + $0x2b0] sm:$0xff]
    %v433 = vld [vmem:[%s3 + $0x2b8] sm:$0xff]
    %v434 = vld [vmem:[%s3 + $0x2c0] sm:$0xff]
    %v435 = vld [vmem:[%s3 + $0x2c8] sm:$0xff]
    %v436 = vld [vmem:[%s3 + $0x2d0] sm:$0xff]
    %v437 = vld [vmem:[%s3 + $0x2d8] sm:$0xff]
    %v438 = vld [vmem:[%s3 + $0x2e0] sm:$0xff]
    %v439 = vld [vmem:[%s3 + $0x2e8] sm:$0xff]
    %v440 = vld [vmem:[%s3 + $0x2f0] sm:$0xff]
    %v441 = vld [vmem:[%s3 + $0x2f8] sm:$0xff]
    %v442 = vld [vmem:[%s3 + $0x300] sm:$0xff]
    %v443 = vld [vmem:[%s3 + $0x308] sm:$0xff]
    %v444 = vld [vmem:[%s3 + $0x310] sm:$0xff]
    %v445 = vld [vmem:[%s3 + $0x318] sm:$0xff]
    %v446 = vld [vmem:[%s3 + $0x320] sm:$0xff]
    %v447 = vld [vmem:[%s3 + $0x328] sm:$0xff]
    %v448 = vld [vmem:[%s3 + $0x330] sm:$0xff]
    %v449 = vld [vmem:[%s3 + $0x338] sm:$0xff]
    %v450 = vld [vmem:[%s3 + $0x340] sm:$0xff]
    %v451 = vld [vmem:[%s3 + $0x348] sm:$0xff]
    %v452 = vld [vmem:[%s3 + $0x350] sm:$0xff]
    %v453 = vld [vmem:[%s3 + $0x358] sm:$0xff]
    %v454 = vld [vmem:[%s3 + $0x360] sm:$0xff]
    %v455 = vld [vmem:[%s3 + $0x368] sm:$0xff]
    %v456 = vld [vmem:[%s3 + $0x370] sm:$0xff]
    %v457 = vld [vmem:[%s3 + $0x378] sm:$0xff]
    %v458 = vld [vmem:[%s3 + $0x380] sm:$0xff]
    %v459 = vld [vmem:[%s3 + $0x388] sm:$0xff]
    %v460 = vld [vmem:[%s3 + $0x390] sm:$0xff]
    %v461 = vld [vmem:[%s3 + $0x398] sm:$0xff]
    %v462 = vld [vmem:[%s3 + $0x3a0] sm:$0xff]
    %v463 = vld [vmem:[%s3 + $0x3a8] sm:$0xff]
    %v464 = vld [vmem:[%s3 + $0x3b0] sm:$0xff]
    %v465 = vld [vmem:[%s3 + $0x3b8] sm:$0xff]
    %v466 = vld [vmem:[%s3 + $0x3c0] sm:$0xff]
    %v467 = vld [vmem:[%s3 + $0x3c8] sm:$0xff]
    %v468 = vld [vmem:[%s3 + $0x3d0] sm:$0xff]
    %v469 = vld [vmem:[%s3 + $0x3d8] sm:$0xff]
    %v470 = vld [vmem:[%s3 + $0x3e0] sm:$0xff]
    %v471 = vld [vmem:[%s3 + $0x3e8] sm:$0xff]
    %v472 = vld [vmem:[%s3 + $0x3f0] sm:$0xff]
    %v473 = vld [vmem:[%s3 + $0x3f8] sm:$0xff]
    %v474 = vld [vmem:[%s4] sm:$0xf]
    %v476 = vlaneseq
    %v477 = vshrl.u32 %v476, 7
    %v478 = vsub.s32 0, %v477
    %v479 = vrot.slane %v474, %v478
    %v480 = vlaneseq
    %v481 = vshrl.u32 %v480, 7
    %v482 = vsub.s32 1, %v481
    %v483 = vrot.slane %v474, %v482
    %v484 = vlaneseq
    %v485 = vshrl.u32 %v484, 7
    %v486 = vsub.s32 2, %v485
    %v487 = vrot.slane %v474, %v486
    %v488 = vlaneseq
    %v489 = vshrl.u32 %v488, 7
    %v490 = vsub.s32 3, %v489
    %v491 = vrot.slane %v474, %v490
    %v624 = vunpack.c.l.b16 %v346
    %v625 = vunpack.c.h.b16 %v346
    %v626 = vunpack.c.l.b16 %v347
    %v627 = vunpack.c.h.b16 %v347
    %v628 = vunpack.c.l.b16 %v348
    %v629 = vunpack.c.h.b16 %v348
    %v630 = vunpack.c.l.b16 %v349
    %v631 = vunpack.c.h.b16 %v349
    %v632 = vunpack.c.l.b16 %v350
    %v633 = vunpack.c.h.b16 %v350
    %v634 = vunpack.c.l.b16 %v351
    %v635 = vunpack.c.h.b16 %v351
    %v636 = vunpack.c.l.b16 %v352
    %v637 = vunpack.c.h.b16 %v352
    %v638 = vunpack.c.l.b16 %v353
    %v639 = vunpack.c.h.b16 %v353
    %v640 = vunpack.c.l.b16 %v354
    %v641 = vunpack.c.h.b16 %v354
    %v642 = vunpack.c.l.b16 %v355
    %v643 = vunpack.c.h.b16 %v355
    %v644 = vunpack.c.l.b16 %v356
    %v645 = vunpack.c.h.b16 %v356
    %v646 = vunpack.c.l.b16 %v357
    %v647 = vunpack.c.h.b16 %v357
    %v648 = vunpack.c.l.b16 %v358
    %v649 = vunpack.c.h.b16 %v358
    %v650 = vunpack.c.l.b16 %v359
    %v651 = vunpack.c.h.b16 %v359
    %v652 = vunpack.c.l.b16 %v360
    %v653 = vunpack.c.h.b16 %v360
    %v654 = vunpack.c.l.b16 %v361
    %v655 = vunpack.c.h.b16 %v361
    %v656 = vunpack.c.l.b16 %v362
    %v657 = vunpack.c.h.b16 %v362
    %v658 = vunpack.c.l.b16 %v363
    %v659 = vunpack.c.h.b16 %v363
    %v660 = vunpack.c.l.b16 %v364
    %v661 = vunpack.c.h.b16 %v364
    %v662 = vunpack.c.l.b16 %v365
    %v663 = vunpack.c.h.b16 %v365
    %v664 = vunpack.c.l.b16 %v366
    %v665 = vunpack.c.h.b16 %v366
    %v666 = vunpack.c.l.b16 %v367
    %v667 = vunpack.c.h.b16 %v367
    %v668 = vunpack.c.l.b16 %v368
    %v669 = vunpack.c.h.b16 %v368
    %v670 = vunpack.c.l.b16 %v369
    %v671 = vunpack.c.h.b16 %v369
    %v672 = vunpack.c.l.b16 %v370
    %v673 = vunpack.c.h.b16 %v370
    %v674 = vunpack.c.l.b16 %v371
    %v675 = vunpack.c.h.b16 %v371
    %v676 = vunpack.c.l.b16 %v372
    %v677 = vunpack.c.h.b16 %v372
    %v678 = vunpack.c.l.b16 %v373
    %v679 = vunpack.c.h.b16 %v373
    %v680 = vunpack.c.l.b16 %v374
    %v681 = vunpack.c.h.b16 %v374
    %v682 = vunpack.c.l.b16 %v375
    %v683 = vunpack.c.h.b16 %v375
    %v684 = vunpack.c.l.b16 %v376
    %v685 = vunpack.c.h.b16 %v376
    %v686 = vunpack.c.l.b16 %v377
    %v687 = vunpack.c.h.b16 %v377
    %v688 = vunpack.c.l.b16 %v378
    %v689 = vunpack.c.h.b16 %v378
    %v690 = vunpack.c.l.b16 %v379
    %v691 = vunpack.c.h.b16 %v379
    %v692 = vunpack.c.l.b16 %v380
    %v693 = vunpack.c.h.b16 %v380
    %v694 = vunpack.c.l.b16 %v381
    %v695 = vunpack.c.h.b16 %v381
    %v696 = vunpack.c.l.b16 %v382
    %v697 = vunpack.c.h.b16 %v382
    %v698 = vunpack.c.l.b16 %v383
    %v699 = vunpack.c.h.b16 %v383
    %v700 = vunpack.c.l.b16 %v384
    %v701 = vunpack.c.h.b16 %v384
    %v702 = vunpack.c.l.b16 %v385
    %v703 = vunpack.c.h.b16 %v385
    %v704 = vunpack.c.l.b16 %v386
    %v705 = vunpack.c.h.b16 %v386
    %v706 = vunpack.c.l.b16 %v387
    %v707 = vunpack.c.h.b16 %v387
    %v708 = vunpack.c.l.b16 %v388
    %v709 = vunpack.c.h.b16 %v388
    %v710 = vunpack.c.l.b16 %v389
    %v711 = vunpack.c.h.b16 %v389
    %v712 = vunpack.c.l.b16 %v390
    %v713 = vunpack.c.h.b16 %v390
    %v714 = vunpack.c.l.b16 %v391
    %v715 = vunpack.c.h.b16 %v391
    %v716 = vunpack.c.l.b16 %v392
    %v717 = vunpack.c.h.b16 %v392
    %v718 = vunpack.c.l.b16 %v393
    %v719 = vunpack.c.h.b16 %v393
    %v720 = vunpack.c.l.b16 %v394
    %v721 = vunpack.c.h.b16 %v394
    %v722 = vunpack.c.l.b16 %v395
    %v723 = vunpack.c.h.b16 %v395
    %v724 = vunpack.c.l.b16 %v396
    %v725 = vunpack.c.h.b16 %v396
    %v726 = vunpack.c.l.b16 %v397
    %v727 = vunpack.c.h.b16 %v397
    %v728 = vunpack.c.l.b16 %v398
    %v729 = vunpack.c.h.b16 %v398
    %v730 = vunpack.c.l.b16 %v399
    %v731 = vunpack.c.h.b16 %v399
    %v732 = vunpack.c.l.b16 %v400
    %v733 = vunpack.c.h.b16 %v400
    %v734 = vunpack.c.l.b16 %v401
    %v735 = vunpack.c.h.b16 %v401
    %v736 = vunpack.c.l.b16 %v402
    %v737 = vunpack.c.h.b16 %v402
    %v738 = vunpack.c.l.b16 %v403
    %v739 = vunpack.c.h.b16 %v403
    %v740 = vunpack.c.l.b16 %v404
    %v741 = vunpack.c.h.b16 %v404
    %v742 = vunpack.c.l.b16 %v405
    %v743 = vunpack.c.h.b16 %v405
    %v744 = vunpack.c.l.b16 %v406
    %v745 = vunpack.c.h.b16 %v406
    %v746 = vunpack.c.l.b16 %v407
    %v747 = vunpack.c.h.b16 %v407
    %v748 = vunpack.c.l.b16 %v408
    %v749 = vunpack.c.h.b16 %v408
    %v750 = vunpack.c.l.b16 %v409
    %v751 = vunpack.c.h.b16 %v409
    %v752 = vunpack.c.l.b16 %v410
    %v753 = vunpack.c.h.b16 %v410
    %v754 = vunpack.c.l.b16 %v411
    %v755 = vunpack.c.h.b16 %v411
    %v756 = vunpack.c.l.b16 %v412
    %v757 = vunpack.c.h.b16 %v412
    %v758 = vunpack.c.l.b16 %v413
    %v759 = vunpack.c.h.b16 %v413
    %v760 = vunpack.c.l.b16 %v414
    %v761 = vunpack.c.h.b16 %v414
    %v762 = vunpack.c.l.b16 %v415
    %v763 = vunpack.c.h.b16 %v415
    %v764 = vunpack.c.l.b16 %v416
    %v765 = vunpack.c.h.b16 %v416
    %v766 = vunpack.c.l.b16 %v417
    %v767 = vunpack.c.h.b16 %v417
    %v768 = vunpack.c.l.b16 %v418
    %v769 = vunpack.c.h.b16 %v418
    %v770 = vunpack.c.l.b16 %v419
    %v771 = vunpack.c.h.b16 %v419
    %v772 = vunpack.c.l.b16 %v420
    %v773 = vunpack.c.h.b16 %v420
    %v774 = vunpack.c.l.b16 %v421
    %v775 = vunpack.c.h.b16 %v421
    %v776 = vunpack.c.l.b16 %v422
    %v777 = vunpack.c.h.b16 %v422
    %v778 = vunpack.c.l.b16 %v423
    %v779 = vunpack.c.h.b16 %v423
    %v780 = vunpack.c.l.b16 %v424
    %v781 = vunpack.c.h.b16 %v424
    %v782 = vunpack.c.l.b16 %v425
    %v783 = vunpack.c.h.b16 %v425
    %v784 = vunpack.c.l.b16 %v426
    %v785 = vunpack.c.h.b16 %v426
    %v786 = vunpack.c.l.b16 %v427
    %v787 = vunpack.c.h.b16 %v427
    %v788 = vunpack.c.l.b16 %v428
    %v789 = vunpack.c.h.b16 %v428
    %v790 = vunpack.c.l.b16 %v429
    %v791 = vunpack.c.h.b16 %v429
    %v792 = vunpack.c.l.b16 %v430
    %v793 = vunpack.c.h.b16 %v430
    %v794 = vunpack.c.l.b16 %v431
    %v795 = vunpack.c.h.b16 %v431
    %v796 = vunpack.c.l.b16 %v432
    %v797 = vunpack.c.h.b16 %v432
    %v798 = vunpack.c.l.b16 %v433
    %v799 = vunpack.c.h.b16 %v433
    %v800 = vunpack.c.l.b16 %v434
    %v801 = vunpack.c.h.b16 %v434
    %v802 = vunpack.c.l.b16 %v435
    %v803 = vunpack.c.h.b16 %v435
    %v804 = vunpack.c.l.b16 %v436
    %v805 = vunpack.c.h.b16 %v436
    %v806 = vunpack.c.l.b16 %v437
    %v807 = vunpack.c.h.b16 %v437
    %v808 = vunpack.c.l.b16 %v438
    %v809 = vunpack.c.h.b16 %v438
    %v810 = vunpack.c.l.b16 %v439
    %v811 = vunpack.c.h.b16 %v439
    %v812 = vunpack.c.l.b16 %v440
    %v813 = vunpack.c.h.b16 %v440
    %v814 = vunpack.c.l.b16 %v441
    %v815 = vunpack.c.h.b16 %v441
    %v816 = vunpack.c.l.b16 %v442
    %v817 = vunpack.c.h.b16 %v442
    %v818 = vunpack.c.l.b16 %v443
    %v819 = vunpack.c.h.b16 %v443
    %v820 = vunpack.c.l.b16 %v444
    %v821 = vunpack.c.h.b16 %v444
    %v822 = vunpack.c.l.b16 %v445
    %v823 = vunpack.c.h.b16 %v445
    %v824 = vunpack.c.l.b16 %v446
    %v825 = vunpack.c.h.b16 %v446
    %v826 = vunpack.c.l.b16 %v447
    %v827 = vunpack.c.h.b16 %v447
    %v828 = vunpack.c.l.b16 %v448
    %v829 = vunpack.c.h.b16 %v448
    %v830 = vunpack.c.l.b16 %v449
    %v831 = vunpack.c.h.b16 %v449
    %v832 = vunpack.c.l.b16 %v450
    %v833 = vunpack.c.h.b16 %v450
    %v834 = vunpack.c.l.b16 %v451
    %v835 = vunpack.c.h.b16 %v451
    %v836 = vunpack.c.l.b16 %v452
    %v837 = vunpack.c.h.b16 %v452
    %v838 = vunpack.c.l.b16 %v453
    %v839 = vunpack.c.h.b16 %v453
    %v840 = vunpack.c.l.b16 %v454
    %v841 = vunpack.c.h.b16 %v454
    %v842 = vunpack.c.l.b16 %v455
    %v843 = vunpack.c.h.b16 %v455
    %v844 = vunpack.c.l.b16 %v456
    %v845 = vunpack.c.h.b16 %v456
    %v846 = vunpack.c.l.b16 %v457
    %v847 = vunpack.c.h.b16 %v457
    %v848 = vunpack.c.l.b16 %v458
    %v849 = vunpack.c.h.b16 %v458
    %v850 = vunpack.c.l.b16 %v459
    %v851 = vunpack.c.h.b16 %v459
    %v852 = vunpack.c.l.b16 %v460
    %v853 = vunpack.c.h.b16 %v460
    %v854 = vunpack.c.l.b16 %v461
    %v855 = vunpack.c.h.b16 %v461
    %v856 = vunpack.c.l.b16 %v462
    %v857 = vunpack.c.h.b16 %v462
    %v858 = vunpack.c.l.b16 %v463
    %v859 = vunpack.c.h.b16 %v463
    %v860 = vunpack.c.l.b16 %v464
    %v861 = vunpack.c.h.b16 %v464
    %v862 = vunpack.c.l.b16 %v465
    %v863 = vunpack.c.h.b16 %v465
    %v864 = vunpack.c.l.b16 %v466
    %v865 = vunpack.c.h.b16 %v466
    %v866 = vunpack.c.l.b16 %v467
    %v867 = vunpack.c.h.b16 %v467
    %v868 = vunpack.c.l.b16 %v468
    %v869 = vunpack.c.h.b16 %v468
    %v870 = vunpack.c.l.b16 %v469
    %v871 = vunpack.c.h.b16 %v469
    %v872 = vunpack.c.l.b16 %v470
    %v873 = vunpack.c.h.b16 %v470
    %v874 = vunpack.c.l.b16 %v471
    %v875 = vunpack.c.h.b16 %v471
    %v876 = vunpack.c.l.b16 %v472
    %v877 = vunpack.c.h.b16 %v472
    %v878 = vunpack.c.l.b16 %v473
    %v879 = vunpack.c.h.b16 %v473
    %v880 = vpack.c.b16 %v628, %v624
    %v881 = vpack.c.b16 %v629, %v625
    %v882 = vpack.c.b16 %v630, %v626
    %v883 = vpack.c.b16 %v631, %v627
    %v884 = vpack.c.b16 %v636, %v632
    %v885 = vpack.c.b16 %v637, %v633
    %v886 = vpack.c.b16 %v638, %v634
    %v887 = vpack.c.b16 %v639, %v635
    %v888 = vpack.c.b16 %v644, %v640
    %v889 = vpack.c.b16 %v645, %v641
    %v890 = vpack.c.b16 %v646, %v642
    %v891 = vpack.c.b16 %v647, %v643
    %v892 = vpack.c.b16 %v652, %v648
    %v893 = vpack.c.b16 %v653, %v649
    %v894 = vpack.c.b16 %v654, %v650
    %v895 = vpack.c.b16 %v655, %v651
    %v896 = vpack.c.b16 %v660, %v656
    %v897 = vpack.c.b16 %v661, %v657
    %v898 = vpack.c.b16 %v662, %v658
    %v899 = vpack.c.b16 %v663, %v659
    %v900 = vpack.c.b16 %v668, %v664
    %v901 = vpack.c.b16 %v669, %v665
    %v902 = vpack.c.b16 %v670, %v666
    %v903 = vpack.c.b16 %v671, %v667
    %v904 = vpack.c.b16 %v676, %v672
    %v905 = vpack.c.b16 %v677, %v673
    %v906 = vpack.c.b16 %v678, %v674
    %v907 = vpack.c.b16 %v679, %v675
    %v908 = vpack.c.b16 %v684, %v680
    %v909 = vpack.c.b16 %v685, %v681
    %v910 = vpack.c.b16 %v686, %v682
    %v911 = vpack.c.b16 %v687, %v683
    %v912 = vpack.c.b16 %v692, %v688
    %v913 = vpack.c.b16 %v693, %v689
    %v914 = vpack.c.b16 %v694, %v690
    %v915 = vpack.c.b16 %v695, %v691
    %v916 = vpack.c.b16 %v700, %v696
    %v917 = vpack.c.b16 %v701, %v697
    %v918 = vpack.c.b16 %v702, %v698
    %v919 = vpack.c.b16 %v703, %v699
    %v920 = vpack.c.b16 %v708, %v704
    %v921 = vpack.c.b16 %v709, %v705
    %v922 = vpack.c.b16 %v710, %v706
    %v923 = vpack.c.b16 %v711, %v707
    %v924 = vpack.c.b16 %v716, %v712
    %v925 = vpack.c.b16 %v717, %v713
    %v926 = vpack.c.b16 %v718, %v714
    %v927 = vpack.c.b16 %v719, %v715
    %v928 = vpack.c.b16 %v724, %v720
    %v929 = vpack.c.b16 %v725, %v721
    %v930 = vpack.c.b16 %v726, %v722
    %v931 = vpack.c.b16 %v727, %v723
    %v932 = vpack.c.b16 %v732, %v728
    %v933 = vpack.c.b16 %v733, %v729
    %v934 = vpack.c.b16 %v734, %v730
    %v935 = vpack.c.b16 %v735, %v731
    %v936 = vpack.c.b16 %v740, %v736
    %v937 = vpack.c.b16 %v741, %v737
    %v938 = vpack.c.b16 %v742, %v738
    %v939 = vpack.c.b16 %v743, %v739
    %v940 = vpack.c.b16 %v748, %v744
    %v941 = vpack.c.b16 %v749, %v745
    %v942 = vpack.c.b16 %v750, %v746
    %v943 = vpack.c.b16 %v751, %v747
    %v944 = vpack.c.b16 %v756, %v752
    %v945 = vpack.c.b16 %v757, %v753
    %v946 = vpack.c.b16 %v758, %v754
    %v947 = vpack.c.b16 %v759, %v755
    %v948 = vpack.c.b16 %v764, %v760
    %v949 = vpack.c.b16 %v765, %v761
    %v950 = vpack.c.b16 %v766, %v762
    %v951 = vpack.c.b16 %v767, %v763
    %v952 = vpack.c.b16 %v772, %v768
    %v953 = vpack.c.b16 %v773, %v769
    %v954 = vpack.c.b16 %v774, %v770
    %v955 = vpack.c.b16 %v775, %v771
    %v956 = vpack.c.b16 %v780, %v776
    %v957 = vpack.c.b16 %v781, %v777
    %v958 = vpack.c.b16 %v782, %v778
    %v959 = vpack.c.b16 %v783, %v779
    %v960 = vpack.c.b16 %v788, %v784
    %v961 = vpack.c.b16 %v789, %v785
    %v962 = vpack.c.b16 %v790, %v786
    %v963 = vpack.c.b16 %v791, %v787
    %v964 = vpack.c.b16 %v796, %v792
    %v965 = vpack.c.b16 %v797, %v793
    %v966 = vpack.c.b16 %v798, %v794
    %v967 = vpack.c.b16 %v799, %v795
    %v968 = vpack.c.b16 %v804, %v800
    %v969 = vpack.c.b16 %v805, %v801
    %v970 = vpack.c.b16 %v806, %v802
    %v971 = vpack.c.b16 %v807, %v803
    %v972 = vpack.c.b16 %v812, %v808
    %v973 = vpack.c.b16 %v813, %v809
    %v974 = vpack.c.b16 %v814, %v810
    %v975 = vpack.c.b16 %v815, %v811
    %v976 = vpack.c.b16 %v820, %v816
    %v977 = vpack.c.b16 %v821, %v817
    %v978 = vpack.c.b16 %v822, %v818
    %v979 = vpack.c.b16 %v823, %v819
    %v980 = vpack.c.b16 %v828, %v824
    %v981 = vpack.c.b16 %v829, %v825
    %v982 = vpack.c.b16 %v830, %v826
    %v983 = vpack.c.b16 %v831, %v827
    %v984 = vpack.c.b16 %v836, %v832
    %v985 = vpack.c.b16 %v837, %v833
    %v986 = vpack.c.b16 %v838, %v834
    %v987 = vpack.c.b16 %v839, %v835
    %v988 = vpack.c.b16 %v844, %v840
    %v989 = vpack.c.b16 %v845, %v841
    %v990 = vpack.c.b16 %v846, %v842
    %v991 = vpack.c.b16 %v847, %v843
    %v992 = vpack.c.b16 %v852, %v848
    %v993 = vpack.c.b16 %v853, %v849
    %v994 = vpack.c.b16 %v854, %v850
    %v995 = vpack.c.b16 %v855, %v851
    %v996 = vpack.c.b16 %v860, %v856
    %v997 = vpack.c.b16 %v861, %v857
    %v998 = vpack.c.b16 %v862, %v858
    %v999 = vpack.c.b16 %v863, %v859
    %v1000 = vpack.c.b16 %v868, %v864
    %v1001 = vpack.c.b16 %v869, %v865
    %v1002 = vpack.c.b16 %v870, %v866
    %v1003 = vpack.c.b16 %v871, %v867
    %v1004 = vpack.c.b16 %v876, %v872
    %v1005 = vpack.c.b16 %v877, %v873
    %v1006 = vpack.c.b16 %v878, %v874
    %v1007 = vpack.c.b16 %v879, %v875
    %1136 = vmatprep.subr.bf16.mxu0 %v881
    %1137 = vmatpush1.bf16.msra.mxu0 %v880
    %1138 = vmatprep.subr.bf16.mxu0 %v885
    %1139 = vmatpush1.bf16.msra.mxu0 %v884
    %1140 = vmatprep.subr.bf16.mxu0 %v889
    %1141 = vmatpush1.bf16.msra.mxu0 %v888
    %1142 = vmatprep.subr.bf16.mxu0 %v893
    %1143 = vmatpush1.bf16.msra.mxu0 %v892
    %1144 = vmatprep.subr.bf16.mxu0 %v897
    %1145 = vmatpush1.bf16.msra.mxu0 %v896
    %1146 = vmatprep.subr.bf16.mxu0 %v901
    %1147 = vmatpush1.bf16.msra.mxu0 %v900
    %1148 = vmatprep.subr.bf16.mxu0 %v905
    %1149 = vmatpush1.bf16.msra.mxu0 %v904
    %1150 = vmatprep.subr.bf16.mxu0 %v909
    %1151 = vmatpush1.bf16.msra.mxu0 %v908
    %1152 = vmatprep.subr.bf16.mxu0 %v913
    %1153 = vmatpush1.bf16.msra.mxu0 %v912
    %1154 = vmatprep.subr.bf16.mxu0 %v917
    %1155 = vmatpush1.bf16.msra.mxu0 %v916
    %1156 = vmatprep.subr.bf16.mxu0 %v921
    %1157 = vmatpush1.bf16.msra.mxu0 %v920
    %1158 = vmatprep.subr.bf16.mxu0 %v925
    %1159 = vmatpush1.bf16.msra.mxu0 %v924
    %1160 = vmatprep.subr.bf16.mxu0 %v929
    %1161 = vmatpush1.bf16.msra.mxu0 %v928
    %1162 = vmatprep.subr.bf16.mxu0 %v933
    %1163 = vmatpush1.bf16.msra.mxu0 %v932
    %1164 = vmatprep.subr.bf16.mxu0 %v937
    %1165 = vmatpush1.bf16.msra.mxu0 %v936
    %1166 = vmatprep.subr.bf16.mxu0 %v941
    %1167 = vmatpush1.bf16.msra.mxu0 %v940
    %1168 = vmatprep.mubr.bf16.mxu0 %v343
    %1169 = vmatmul.mubr.bf16.gmra.mrb[0].mxu0 %v342
    %v1170 = vpop.f32.mrb[0].mxu0
    %v1171 = vadd.f32 %v479, %v1170
    %v1172 = vpop.f32.mrb[0].mxu0
    %v1173 = vadd.f32 %v483, %v1172
    %v1174 = vpop.f32.mrb[0].mxu0
    %v1175 = vpop.f32.mrb[0].mxu0
    %1176 = vdwg.mxu0
    %1177 = vmatprep.subr.bf16.mxu0 %v945
    %1178 = vmatpush1.bf16.msra.mxu0 %v944
    %1179 = vmatprep.subr.bf16.mxu0 %v949
    %1180 = vmatpush1.bf16.msra.mxu0 %v948
    %1181 = vmatprep.subr.bf16.mxu0 %v953
    %1182 = vmatpush1.bf16.msra.mxu0 %v952
    %1183 = vmatprep.subr.bf16.mxu0 %v957
    %1184 = vmatpush1.bf16.msra.mxu0 %v956
    %1185 = vmatprep.subr.bf16.mxu0 %v961
    %1186 = vmatpush1.bf16.msra.mxu0 %v960
    %1187 = vmatprep.subr.bf16.mxu0 %v965
    %1188 = vmatpush1.bf16.msra.mxu0 %v964
    %1189 = vmatprep.subr.bf16.mxu0 %v969
    %1190 = vmatpush1.bf16.msra.mxu0 %v968
    %1191 = vmatprep.subr.bf16.mxu0 %v973
    %1192 = vmatpush1.bf16.msra.mxu0 %v972
    %1193 = vmatprep.subr.bf16.mxu0 %v977
    %1194 = vmatpush1.bf16.msra.mxu0 %v976
    %1195 = vmatprep.subr.bf16.mxu0 %v981
    %1196 = vmatpush1.bf16.msra.mxu0 %v980
    %1197 = vmatprep.subr.bf16.mxu0 %v985
    %1198 = vmatpush1.bf16.msra.mxu0 %v984
    %1199 = vmatprep.subr.bf16.mxu0 %v989
    %1200 = vmatpush1.bf16.msra.mxu0 %v988
    %1201 = vmatprep.subr.bf16.mxu0 %v993
    %1202 = vmatpush1.bf16.msra.mxu0 %v992
    %1203 = vmatprep.subr.bf16.mxu0 %v997
    %1204 = vmatpush1.bf16.msra.mxu0 %v996
    %1205 = vmatprep.subr.bf16.mxu0 %v1001
    %1206 = vmatpush1.bf16.msra.mxu0 %v1000
    %1207 = vmatprep.subr.bf16.mxu0 %v1005
    %1208 = vmatpush1.bf16.msra.mxu0 %v1004
    %1209 = vmatprep.mubr.bf16.mxu0 %v345
    %1210 = vmatmul.mubr.bf16.gmra.mrb[0].mxu0 %v344
    %v1211 = vpop.f32.mrb[0].mxu0
    %v1212 = vadd.f32 %v1171, %v1211
    %v1213 = vpop.f32.mrb[0].mxu0
    %v1214 = vadd.f32 %v1173, %v1213
    %v1215 = vpop.f32.mrb[0].mxu0
    %v1216 = vpop.f32.mrb[0].mxu0
    %1217 = vdwg.mxu0
    %1218 = vmatprep.subr.bf16.mxu0 %v883
    %1219 = vmatpush1.bf16.msra.mxu0 %v882
    %1220 = vmatprep.subr.bf16.mxu0 %v887
    %1221 = vmatpush1.bf16.msra.mxu0 %v886
    %1222 = vmatprep.subr.bf16.mxu0 %v891
    %1223 = vmatpush1.bf16.msra.mxu0 %v890
    %1224 = vmatprep.subr.bf16.mxu0 %v895
    %1225 = vmatpush1.bf16.msra.mxu0 %v894
    %1226 = vmatprep.subr.bf16.mxu0 %v899
    %1227 = vmatpush1.bf16.msra.mxu0 %v898
    %1228 = vmatprep.subr.bf16.mxu0 %v903
    %1229 = vmatpush1.bf16.msra.mxu0 %v902
    %1230 = vmatprep.subr.bf16.mxu0 %v907
    %1231 = vmatpush1.bf16.msra.mxu0 %v906
    %1232 = vmatprep.subr.bf16.mxu0 %v911
    %1233 = vmatpush1.bf16.msra.mxu0 %v910
    %1234 = vmatprep.subr.bf16.mxu0 %v915
    %1235 = vmatpush1.bf16.msra.mxu0 %v914
    %1236 = vmatprep.subr.bf16.mxu0 %v919
    %1237 = vmatpush1.bf16.msra.mxu0 %v918
    %1238 = vmatprep.subr.bf16.mxu0 %v923
    %1239 = vmatpush1.bf16.msra.mxu0 %v922
    %1240 = vmatprep.subr.bf16.mxu0 %v927
    %1241 = vmatpush1.bf16.msra.mxu0 %v926
    %1242 = vmatprep.subr.bf16.mxu0 %v931
    %1243 = vmatpush1.bf16.msra.mxu0 %v930
    %1244 = vmatprep.subr.bf16.mxu0 %v935
    %1245 = vmatpush1.bf16.msra.mxu0 %v934
    %1246 = vmatprep.subr.bf16.mxu0 %v939
    %1247 = vmatpush1.bf16.msra.mxu0 %v938
    %1248 = vmatprep.subr.bf16.mxu0 %v943
    %1249 = vmatpush1.bf16.msra.mxu0 %v942
    %1250 = vmatprep.mubr.bf16.mxu0 %v343
    %1251 = vmatmul.mubr.bf16.gmra.mrb[0].mxu0 %v342
    %v1252 = vpop.f32.mrb[0].mxu0
    %v1253 = vadd.f32 %v487, %v1252
    %v1254 = vpop.f32.mrb[0].mxu0
    %v1255 = vadd.f32 %v491, %v1254
    %v1256 = vpop.f32.mrb[0].mxu0
    %v1257 = vpop.f32.mrb[0].mxu0
    %1258 = vdwg.mxu0
    %1259 = vmatprep.subr.bf16.mxu0 %v947
    %1260 = vmatpush1.bf16.msra.mxu0 %v946
    %1261 = vmatprep.subr.bf16.mxu0 %v951
    %1262 = vmatpush1.bf16.msra.mxu0 %v950
    %1263 = vmatprep.subr.bf16.mxu0 %v955
    %1264 = vmatpush1.bf16.msra.mxu0 %v954
    %1265 = vmatprep.subr.bf16.mxu0 %v959
    %1266 = vmatpush1.bf16.msra.mxu0 %v958
    %1267 = vmatprep.subr.bf16.mxu0 %v963
    %1268 = vmatpush1.bf16.msra.mxu0 %v962
    %1269 = vmatprep.subr.bf16.mxu0 %v967
    %1270 = vmatpush1.bf16.msra.mxu0 %v966
    %1271 = vmatprep.subr.bf16.mxu0 %v971
    %1272 = vmatpush1.bf16.msra.mxu0 %v970
    %1273 = vmatprep.subr.bf16.mxu0 %v975
    %1274 = vmatpush1.bf16.msra.mxu0 %v974
    %1275 = vmatprep.subr.bf16.mxu0 %v979
    %1276 = vmatpush1.bf16.msra.mxu0 %v978
    %1277 = vmatprep.subr.bf16.mxu0 %v983
    %1278 = vmatpush1.bf16.msra.mxu0 %v982
    %1279 = vmatprep.subr.bf16.mxu0 %v987
    %1280 = vmatpush1.bf16.msra.mxu0 %v986
    %1281 = vmatprep.subr.bf16.mxu0 %v991
    %1282 = vmatpush1.bf16.msra.mxu0 %v990
    %1283 = vmatprep.subr.bf16.mxu0 %v995
    %1284 = vmatpush1.bf16.msra.mxu0 %v994
    %1285 = vmatprep.subr.bf16.mxu0 %v999
    %1286 = vmatpush1.bf16.msra.mxu0 %v998
    %1287 = vmatprep.subr.bf16.mxu0 %v1003
    %1288 = vmatpush1.bf16.msra.mxu0 %v1002
    %1289 = vmatprep.subr.bf16.mxu0 %v1007
    %1290 = vmatpush1.bf16.msra.mxu0 %v1006
    %1291 = vmatprep.mubr.bf16.mxu0 %v345
    %1292 = vmatmul.mubr.bf16.gmra.mrb[0].mxu0 %v344
    %v1293 = vpop.f32.mrb[0].mxu0
    %v1294 = vadd.f32 %v1253, %v1293
    %v1295 = vpop.f32.mrb[0].mxu0
    %v1296 = vadd.f32 %v1255, %v1295
    %v1297 = vpop.f32.mrb[0].mxu0
    %v1298 = vpop.f32.mrb[0].mxu0
    %1299 = vdwg.mxu0
    %v1300 = vmax.f32 %v1212, 0.0
    %v1301 = vmax.f32 %v1214, 0.0
    %v1302 = vmax.f32 %v1294, 0.0
    %v1303 = vmax.f32 %v1296, 0.0
    %v1304 = vpack.c.bf16 %v1300, %v1300
    %v1305 = vpack.c.bf16 %v1301, %v1301
    %v1306 = vpack.c.bf16 %v1302, %v1302
    %v1307 = vpack.c.bf16 %v1303, %v1303
    %v1308 = vld [vmem:[%s5] sm:$0xf]
    %v1309 = vld [vmem:[%s5 + $0x4] sm:$0xf]
    %v1310 = vld [vmem:[%s5 + $0x8] sm:$0xf]
    %v1311 = vld [vmem:[%s5 + $0xc] sm:$0xf]
    %v1312 = vld [vmem:[%s5 + $0x10] sm:$0xf]
    %v1313 = vld [vmem:[%s5 + $0x14] sm:$0xf]
    %v1314 = vld [vmem:[%s5 + $0x18] sm:$0xf]
    %v1315 = vld [vmem:[%s5 + $0x1c] sm:$0xf]
    %v1316 = vld [vmem:[%s5 + $0x20] sm:$0xf]
    %v1317 = vld [vmem:[%s5 + $0x24] sm:$0xf]
    %v1318 = vld [vmem:[%s5 + $0x28] sm:$0xf]
    %v1319 = vld [vmem:[%s5 + $0x2c] sm:$0xf]
    %v1320 = vld [vmem:[%s5 + $0x30] sm:$0xf]
    %v1321 = vld [vmem:[%s5 + $0x34] sm:$0xf]
    %v1322 = vld [vmem:[%s5 + $0x38] sm:$0xf]
    %v1323 = vld [vmem:[%s5 + $0x3c] sm:$0xf]
    %v1324 = vld [vmem:[%s5 + $0x40] sm:$0xf]
    %v1325 = vld [vmem:[%s5 + $0x44] sm:$0xf]
    %v1326 = vld [vmem:[%s5 + $0x48] sm:$0xf]
    %v1327 = vld [vmem:[%s5 + $0x4c] sm:$0xf]
    %v1328 = vld [vmem:[%s5 + $0x50] sm:$0xf]
    %v1329 = vld [vmem:[%s5 + $0x54] sm:$0xf]
    %v1330 = vld [vmem:[%s5 + $0x58] sm:$0xf]
    %v1331 = vld [vmem:[%s5 + $0x5c] sm:$0xf]
    %v1332 = vld [vmem:[%s5 + $0x60] sm:$0xf]
    %v1333 = vld [vmem:[%s5 + $0x64] sm:$0xf]
    %v1334 = vld [vmem:[%s5 + $0x68] sm:$0xf]
    %v1335 = vld [vmem:[%s5 + $0x6c] sm:$0xf]
    %v1336 = vld [vmem:[%s5 + $0x70] sm:$0xf]
    %v1337 = vld [vmem:[%s5 + $0x74] sm:$0xf]
    %v1338 = vld [vmem:[%s5 + $0x78] sm:$0xf]
    %v1339 = vld [vmem:[%s5 + $0x7c] sm:$0xf]
    %v1340 = vld [vmem:[%s5 + $0x80] sm:$0xf]
    %v1341 = vld [vmem:[%s5 + $0x84] sm:$0xf]
    %v1342 = vld [vmem:[%s5 + $0x88] sm:$0xf]
    %v1343 = vld [vmem:[%s5 + $0x8c] sm:$0xf]
    %v1344 = vld [vmem:[%s5 + $0x90] sm:$0xf]
    %v1345 = vld [vmem:[%s5 + $0x94] sm:$0xf]
    %v1346 = vld [vmem:[%s5 + $0x98] sm:$0xf]
    %v1347 = vld [vmem:[%s5 + $0x9c] sm:$0xf]
    %v1348 = vld [vmem:[%s5 + $0xa0] sm:$0xf]
    %v1349 = vld [vmem:[%s5 + $0xa4] sm:$0xf]
    %v1350 = vld [vmem:[%s5 + $0xa8] sm:$0xf]
    %v1351 = vld [vmem:[%s5 + $0xac] sm:$0xf]
    %v1352 = vld [vmem:[%s5 + $0xb0] sm:$0xf]
    %v1353 = vld [vmem:[%s5 + $0xb4] sm:$0xf]
    %v1354 = vld [vmem:[%s5 + $0xb8] sm:$0xf]
    %v1355 = vld [vmem:[%s5 + $0xbc] sm:$0xf]
    %v1356 = vld [vmem:[%s5 + $0xc0] sm:$0xf]
    %v1357 = vld [vmem:[%s5 + $0xc4] sm:$0xf]
    %v1358 = vld [vmem:[%s5 + $0xc8] sm:$0xf]
    %v1359 = vld [vmem:[%s5 + $0xcc] sm:$0xf]
    %v1360 = vld [vmem:[%s5 + $0xd0] sm:$0xf]
    %v1361 = vld [vmem:[%s5 + $0xd4] sm:$0xf]
    %v1362 = vld [vmem:[%s5 + $0xd8] sm:$0xf]
    %v1363 = vld [vmem:[%s5 + $0xdc] sm:$0xf]
    %v1364 = vld [vmem:[%s5 + $0xe0] sm:$0xf]
    %v1365 = vld [vmem:[%s5 + $0xe4] sm:$0xf]
    %v1366 = vld [vmem:[%s5 + $0xe8] sm:$0xf]
    %v1367 = vld [vmem:[%s5 + $0xec] sm:$0xf]
    %v1368 = vld [vmem:[%s5 + $0xf0] sm:$0xf]
    %v1369 = vld [vmem:[%s5 + $0xf4] sm:$0xf]
    %v1370 = vld [vmem:[%s5 + $0xf8] sm:$0xf]
    %v1371 = vld [vmem:[%s5 + $0xfc] sm:$0xf]
    %v1372 = vld [vmem:[%s6] sm:$0x1]
    %v1374 = vlaneseq
    %v1375 = vshrl.u32 %v1374, 7
    %v1376 = vsub.s32 0, %v1375
    %v1377 = vrot.slane %v1372, %v1376
    %v1443 = vunpack.c.l.b16 %v1308
    %v1444 = vunpack.c.l.b16 %v1309
    %v1445 = vunpack.c.l.b16 %v1310
    %v1446 = vunpack.c.l.b16 %v1311
    %v1447 = vunpack.c.l.b16 %v1312
    %v1448 = vunpack.c.l.b16 %v1313
    %v1449 = vunpack.c.l.b16 %v1314
    %v1450 = vunpack.c.l.b16 %v1315
    %v1451 = vunpack.c.l.b16 %v1316
    %v1452 = vunpack.c.l.b16 %v1317
    %v1453 = vunpack.c.l.b16 %v1318
    %v1454 = vunpack.c.l.b16 %v1319
    %v1455 = vunpack.c.l.b16 %v1320
    %v1456 = vunpack.c.l.b16 %v1321
    %v1457 = vunpack.c.l.b16 %v1322
    %v1458 = vunpack.c.l.b16 %v1323
    %v1459 = vunpack.c.l.b16 %v1324
    %v1460 = vunpack.c.l.b16 %v1325
    %v1461 = vunpack.c.l.b16 %v1326
    %v1462 = vunpack.c.l.b16 %v1327
    %v1463 = vunpack.c.l.b16 %v1328
    %v1464 = vunpack.c.l.b16 %v1329
    %v1465 = vunpack.c.l.b16 %v1330
    %v1466 = vunpack.c.l.b16 %v1331
    %v1467 = vunpack.c.l.b16 %v1332
    %v1468 = vunpack.c.l.b16 %v1333
    %v1469 = vunpack.c.l.b16 %v1334
    %v1470 = vunpack.c.l.b16 %v1335
    %v1471 = vunpack.c.l.b16 %v1336
    %v1472 = vunpack.c.l.b16 %v1337
    %v1473 = vunpack.c.l.b16 %v1338
    %v1474 = vunpack.c.l.b16 %v1339
    %v1475 = vunpack.c.l.b16 %v1340
    %v1476 = vunpack.c.l.b16 %v1341
    %v1477 = vunpack.c.l.b16 %v1342
    %v1478 = vunpack.c.l.b16 %v1343
    %v1479 = vunpack.c.l.b16 %v1344
    %v1480 = vunpack.c.l.b16 %v1345
    %v1481 = vunpack.c.l.b16 %v1346
    %v1482 = vunpack.c.l.b16 %v1347
    %v1483 = vunpack.c.l.b16 %v1348
    %v1484 = vunpack.c.l.b16 %v1349
    %v1485 = vunpack.c.l.b16 %v1350
    %v1486 = vunpack.c.l.b16 %v1351
    %v1487 = vunpack.c.l.b16 %v1352
    %v1488 = vunpack.c.l.b16 %v1353
    %v1489 = vunpack.c.l.b16 %v1354
    %v1490 = vunpack.c.l.b16 %v1355
    %v1491 = vunpack.c.l.b16 %v1356
    %v1492 = vunpack.c.l.b16 %v1357
    %v1493 = vunpack.c.l.b16 %v1358
    %v1494 = vunpack.c.l.b16 %v1359
    %v1495 = vunpack.c.l.b16 %v1360
    %v1496 = vunpack.c.l.b16 %v1361
    %v1497 = vunpack.c.l.b16 %v1362
    %v1498 = vunpack.c.l.b16 %v1363
    %v1499 = vunpack.c.l.b16 %v1364
    %v1500 = vunpack.c.l.b16 %v1365
    %v1501 = vunpack.c.l.b16 %v1366
    %v1502 = vunpack.c.l.b16 %v1367
    %v1503 = vunpack.c.l.b16 %v1368
    %v1504 = vunpack.c.l.b16 %v1369
    %v1505 = vunpack.c.l.b16 %v1370
    %v1506 = vunpack.c.l.b16 %v1371
    %v1507 = vpack.c.b16 %v1444, %v1443
    %v1508 = vpack.c.b16 %v1446, %v1445
    %v1509 = vpack.c.b16 %v1448, %v1447
    %v1510 = vpack.c.b16 %v1450, %v1449
    %v1511 = vpack.c.b16 %v1452, %v1451
    %v1512 = vpack.c.b16 %v1454, %v1453
    %v1513 = vpack.c.b16 %v1456, %v1455
    %v1514 = vpack.c.b16 %v1458, %v1457
    %v1515 = vpack.c.b16 %v1460, %v1459
    %v1516 = vpack.c.b16 %v1462, %v1461
    %v1517 = vpack.c.b16 %v1464, %v1463
    %v1518 = vpack.c.b16 %v1466, %v1465
    %v1519 = vpack.c.b16 %v1468, %v1467
    %v1520 = vpack.c.b16 %v1470, %v1469
    %v1521 = vpack.c.b16 %v1472, %v1471
    %v1522 = vpack.c.b16 %v1474, %v1473
    %v1523 = vpack.c.b16 %v1476, %v1475
    %v1524 = vpack.c.b16 %v1478, %v1477
    %v1525 = vpack.c.b16 %v1480, %v1479
    %v1526 = vpack.c.b16 %v1482, %v1481
    %v1527 = vpack.c.b16 %v1484, %v1483
    %v1528 = vpack.c.b16 %v1486, %v1485
    %v1529 = vpack.c.b16 %v1488, %v1487
    %v1530 = vpack.c.b16 %v1490, %v1489
    %v1531 = vpack.c.b16 %v1492, %v1491
    %v1532 = vpack.c.b16 %v1494, %v1493
    %v1533 = vpack.c.b16 %v1496, %v1495
    %v1534 = vpack.c.b16 %v1498, %v1497
    %v1535 = vpack.c.b16 %v1500, %v1499
    %v1536 = vpack.c.b16 %v1502, %v1501
    %v1537 = vpack.c.b16 %v1504, %v1503
    %v1538 = vpack.c.b16 %v1506, %v1505
    %1571 = vmatprep.subr.bf16.mxu0 0
    %1572 = vmatpush1.bf16.msra.mxu0 %v1507
    %1573 = vmatprep.subr.bf16.mxu0 0
    %1574 = vmatpush1.bf16.msra.mxu0 %v1508
    %1575 = vmatprep.subr.bf16.mxu0 0
    %1576 = vmatpush1.bf16.msra.mxu0 %v1509
    %1577 = vmatprep.subr.bf16.mxu0 0
    %1578 = vmatpush1.bf16.msra.mxu0 %v1510
    %1579 = vmatprep.subr.bf16.mxu0 0
    %1580 = vmatpush1.bf16.msra.mxu0 %v1511
    %1581 = vmatprep.subr.bf16.mxu0 0
    %1582 = vmatpush1.bf16.msra.mxu0 %v1512
    %1583 = vmatprep.subr.bf16.mxu0 0
    %1584 = vmatpush1.bf16.msra.mxu0 %v1513
    %1585 = vmatprep.subr.bf16.mxu0 0
    %1586 = vmatpush1.bf16.msra.mxu0 %v1514
    %1587 = vmatprep.subr.bf16.mxu0 0
    %1588 = vmatpush1.bf16.msra.mxu0 %v1515
    %1589 = vmatprep.subr.bf16.mxu0 0
    %1590 = vmatpush1.bf16.msra.mxu0 %v1516
    %1591 = vmatprep.subr.bf16.mxu0 0
    %1592 = vmatpush1.bf16.msra.mxu0 %v1517
    %1593 = vmatprep.subr.bf16.mxu0 0
    %1594 = vmatpush1.bf16.msra.mxu0 %v1518
    %1595 = vmatprep.subr.bf16.mxu0 0
    %1596 = vmatpush1.bf16.msra.mxu0 %v1519
    %1597 = vmatprep.subr.bf16.mxu0 0
    %1598 = vmatpush1.bf16.msra.mxu0 %v1520
    %1599 = vmatprep.subr.bf16.mxu0 0
    %1600 = vmatpush1.bf16.msra.mxu0 %v1521
    %1601 = vmatprep.subr.bf16.mxu0 0
    %1602 = vmatpush1.bf16.msra.mxu0 %v1522
    %1603 = vmatprep.mubr.bf16.mxu0 %v1305
    %1604 = vmatmul.mubr.bf16.gmra.mrb[0].mxu0 %v1304
    %v1605 = vpop.f32.mrb[0].mxu0
    %v1606 = vadd.f32 %v1377, %v1605
    %v1607 = vpop.f32.mrb[0].mxu0
    %v1608 = vpop.f32.mrb[0].mxu0
    %v1609 = vpop.f32.mrb[0].mxu0
    %1610 = vdwg.mxu0
    %1611 = vmatprep.subr.bf16.mxu0 0
    %1612 = vmatpush1.bf16.msra.mxu0 %v1523
    %1613 = vmatprep.subr.bf16.mxu0 0
    %1614 = vmatpush1.bf16.msra.mxu0 %v1524
    %1615 = vmatprep.subr.bf16.mxu0 0
    %1616 = vmatpush1.bf16.msra.mxu0 %v1525
    %1617 = vmatprep.subr.bf16.mxu0 0
    %1618 = vmatpush1.bf16.msra.mxu0 %v1526
    %1619 = vmatprep.subr.bf16.mxu0 0
    %1620 = vmatpush1.bf16.msra.mxu0 %v1527
    %1621 = vmatprep.subr.bf16.mxu0 0
    %1622 = vmatpush1.bf16.msra.mxu0 %v1528
    %1623 = vmatprep.subr.bf16.mxu0 0
    %1624 = vmatpush1.bf16.msra.mxu0 %v1529
    %1625 = vmatprep.subr.bf16.mxu0 0
    %1626 = vmatpush1.bf16.msra.mxu0 %v1530
    %1627 = vmatprep.subr.bf16.mxu0 0
    %1628 = vmatpush1.bf16.msra.mxu0 %v1531
    %1629 = vmatprep.subr.bf16.mxu0 0
    %1630 = vmatpush1.bf16.msra.mxu0 %v1532
    %1631 = vmatprep.subr.bf16.mxu0 0
    %1632 = vmatpush1.bf16.msra.mxu0 %v1533
    %1633 = vmatprep.subr.bf16.mxu0 0
    %1634 = vmatpush1.bf16.msra.mxu0 %v1534
    %1635 = vmatprep.subr.bf16.mxu0 0
    %1636 = vmatpush1.bf16.msra.mxu0 %v1535
    %1637 = vmatprep.subr.bf16.mxu0 0
    %1638 = vmatpush1.bf16.msra.mxu0 %v1536
    %1639 = vmatprep.subr.bf16.mxu0 0
    %1640 = vmatpush1.bf16.msra.mxu0 %v1537
    %1641 = vmatprep.subr.bf16.mxu0 0
    %1642 = vmatpush1.bf16.msra.mxu0 %v1538
    %1643 = vmatprep.mubr.bf16.mxu0 %v1307
    %1644 = vmatmul.mubr.bf16.gmra.mrb[0].mxu0 %v1306
    %v1645 = vpop.f32.mrb[0].mxu0
    %v1646 = vadd.f32 %v1606, %v1645
    %v1647 = vpop.f32.mrb[0].mxu0
    %v1648 = vpop.f32.mrb[0].mxu0
    %v1649 = vpop.f32.mrb[0].mxu0
    %1650 = vdwg.mxu0
    %v1651 = vmax.f32 %v1646, 0.0
    %v1652 = vpack.c.bf16 %v1651, %v1651
    %v1653 = vld [vmem:[%s7] sm:$0xf]
    %v1654 = vld [vmem:[%s7 + $0x4] sm:$0xf]
    %v1655 = vld [vmem:[%s7 + $0x8] sm:$0xf]
    %v1656 = vld [vmem:[%s7 + $0xc] sm:$0xf]
    %v1657 = vld [vmem:[%s7 + $0x10] sm:$0xf]
    %v1658 = vld [vmem:[%s7 + $0x14] sm:$0xf]
    %v1659 = vld [vmem:[%s7 + $0x18] sm:$0xf]
    %v1660 = vld [vmem:[%s7 + $0x1c] sm:$0xf]
    %v1661 = vld [vmem:[%s7 + $0x20] sm:$0xf]
    %v1662 = vld [vmem:[%s7 + $0x24] sm:$0xf]
    %v1663 = vld [vmem:[%s7 + $0x28] sm:$0xf]
    %v1664 = vld [vmem:[%s7 + $0x2c] sm:$0xf]
    %v1665 = vld [vmem:[%s7 + $0x30] sm:$0xf]
    %v1666 = vld [vmem:[%s7 + $0x34] sm:$0xf]
    %v1667 = vld [vmem:[%s7 + $0x38] sm:$0xf]
    %v1668 = vld [vmem:[%s7 + $0x3c] sm:$0xf]
    %v1669 = vld [vmem:[%s8] sm:$0x1]
    %v1671 = vlaneseq
    %v1672 = vshrl.u32 %v1671, 7
    %v1673 = vsub.s32 0, %v1672
    %v1674 = vrot.slane %v1669, %v1673
    %v1692 = vunpack.c.l.b16 %v1653
    %v1693 = vunpack.c.l.b16 %v1654
    %v1694 = vunpack.c.l.b16 %v1655
    %v1695 = vunpack.c.l.b16 %v1656
    %v1696 = vunpack.c.l.b16 %v1657
    %v1697 = vunpack.c.l.b16 %v1658
    %v1698 = vunpack.c.l.b16 %v1659
    %v1699 = vunpack.c.l.b16 %v1660
    %v1700 = vunpack.c.l.b16 %v1661
    %v1701 = vunpack.c.l.b16 %v1662
    %v1702 = vunpack.c.l.b16 %v1663
    %v1703 = vunpack.c.l.b16 %v1664
    %v1704 = vunpack.c.l.b16 %v1665
    %v1705 = vunpack.c.l.b16 %v1666
    %v1706 = vunpack.c.l.b16 %v1667
    %v1707 = vunpack.c.l.b16 %v1668
    %v1708 = vpack.c.b16 %v1693, %v1692
    %v1709 = vpack.c.b16 %v1695, %v1694
    %v1710 = vpack.c.b16 %v1697, %v1696
    %v1711 = vpack.c.b16 %v1699, %v1698
    %v1712 = vpack.c.b16 %v1701, %v1700
    %v1713 = vpack.c.b16 %v1703, %v1702
    %v1714 = vpack.c.b16 %v1705, %v1704
    %v1715 = vpack.c.b16 %v1707, %v1706
    %1724 = vmatprep.subr.bf16.mxu0 0
    %1725 = vmatpush1.bf16.msra.mxu0 %v1708
    %1726 = vmatprep.subr.bf16.mxu0 0
    %1727 = vmatpush1.bf16.msra.mxu0 %v1709
    %1728 = vmatprep.subr.bf16.mxu0 0
    %1729 = vmatpush1.bf16.msra.mxu0 %v1710
    %1730 = vmatprep.subr.bf16.mxu0 0
    %1731 = vmatpush1.bf16.msra.mxu0 %v1711
    %1732 = vmatprep.subr.bf16.mxu0 0
    %1733 = vmatpush1.bf16.msra.mxu0 %v1712
    %1734 = vmatprep.subr.bf16.mxu0 0
    %1735 = vmatpush1.bf16.msra.mxu0 %v1713
    %1736 = vmatprep.subr.bf16.mxu0 0
    %1737 = vmatpush1.bf16.msra.mxu0 %v1714
    %1738 = vmatprep.subr.bf16.mxu0 0
    %1739 = vmatpush1.bf16.msra.mxu0 %v1715
    %1740 = vmatprep.subr.bf16.mxu0 0
    %1741 = vmatpush1.bf16.msra.mxu0 0
    %1742 = vmatprep.subr.bf16.mxu0 0
    %1743 = vmatpush1.bf16.msra.mxu0 0
    %1744 = vmatprep.subr.bf16.mxu0 0
    %1745 = vmatpush1.bf16.msra.mxu0 0
    %1746 = vmatprep.subr.bf16.mxu0 0
    %1747 = vmatpush1.bf16.msra.mxu0 0
    %1748 = vmatprep.subr.bf16.mxu0 0
    %1749 = vmatpush1.bf16.msra.mxu0 0
    %1750 = vmatprep.subr.bf16.mxu0 0
    %1751 = vmatpush1.bf16.msra.mxu0 0
    %1752 = vmatprep.subr.bf16.mxu0 0
    %1753 = vmatpush1.bf16.msra.mxu0 0
    %1754 = vmatprep.subr.bf16.mxu0 0
    %1755 = vmatpush1.bf16.msra.mxu0 0
    %1756 = vmatprep.mubr.bf16.mxu0 0
    %1757 = vmatmul.mubr.bf16.gmra.mrb[0].mxu0 %v1652
    %v1758 = vpop.f32.mrb[0].mxu0
    %v1759 = vadd.f32 %v1674, %v1758
    %v1760 = vpop.f32.mrb[0].mxu0
    %v1761 = vpop.f32.mrb[0].mxu0
    %v1762 = vpop.f32.mrb[0].mxu0
    %1763 = vdwg.mxu0
    %v1764 = vmax.f32 %v1759, 0.0
    %v1765 = vpack.c.bf16 %v1764, %v1764
    %v1766 = vld [vmem:[%s9] sm:$0xf]
    %v1767 = vld [vmem:[%s9 + $0x4] sm:$0xf]
    %v1768 = vld [vmem:[%s9 + $0x8] sm:$0xf]
    %v1769 = vld [vmem:[%s9 + $0xc] sm:$0xf]
    %v1770 = vld [vmem:[%s9 + $0x10] sm:$0xf]
    %v1771 = vld [vmem:[%s9 + $0x14] sm:$0xf]
    %v1772 = vld [vmem:[%s9 + $0x18] sm:$0xf]
    %v1773 = vld [vmem:[%s9 + $0x1c] sm:$0xf]
    %v1774 = vld [vmem:[%s9 + $0x20] sm:$0xf]
    %v1775 = vld [vmem:[%s9 + $0x24] sm:$0xf]
    %v1776 = vld [vmem:[%s9 + $0x28] sm:$0xf]
    %v1777 = vld [vmem:[%s9 + $0x2c] sm:$0xf]
    %v1778 = vld [vmem:[%s9 + $0x30] sm:$0xf]
    %v1779 = vld [vmem:[%s9 + $0x34] sm:$0xf]
    %v1780 = vld [vmem:[%s9 + $0x38] sm:$0xf]
    %v1781 = vld [vmem:[%s9 + $0x3c] sm:$0xf]
    %v1782 = vld [vmem:[%s10] sm:$0x1]
    %v1784 = vlaneseq
    %v1785 = vshrl.u32 %v1784, 7
    %v1786 = vsub.s32 0, %v1785
    %v1787 = vrot.slane %v1782, %v1786
    %v1805 = vunpack.c.l.b16 %v1766
    %v1806 = vunpack.c.l.b16 %v1767
    %v1807 = vunpack.c.l.b16 %v1768
    %v1808 = vunpack.c.l.b16 %v1769
    %v1809 = vunpack.c.l.b16 %v1770
    %v1810 = vunpack.c.l.b16 %v1771
    %v1811 = vunpack.c.l.b16 %v1772
    %v1812 = vunpack.c.l.b16 %v1773
    %v1813 = vunpack.c.l.b16 %v1774
    %v1814 = vunpack.c.l.b16 %v1775
    %v1815 = vunpack.c.l.b16 %v1776
    %v1816 = vunpack.c.l.b16 %v1777
    %v1817 = vunpack.c.l.b16 %v1778
    %v1818 = vunpack.c.l.b16 %v1779
    %v1819 = vunpack.c.l.b16 %v1780
    %v1820 = vunpack.c.l.b16 %v1781
    %v1821 = vpack.c.b16 %v1806, %v1805
    %v1822 = vpack.c.b16 %v1808, %v1807
    %v1823 = vpack.c.b16 %v1810, %v1809
    %v1824 = vpack.c.b16 %v1812, %v1811
    %v1825 = vpack.c.b16 %v1814, %v1813
    %v1826 = vpack.c.b16 %v1816, %v1815
    %v1827 = vpack.c.b16 %v1818, %v1817
    %v1828 = vpack.c.b16 %v1820, %v1819
    %1837 = vmatprep.subr.bf16.mxu0 0
    %1838 = vmatpush1.bf16.msra.mxu0 %v1821
    %1839 = vmatprep.subr.bf16.mxu0 0
    %1840 = vmatpush1.bf16.msra.mxu0 %v1822
    %1841 = vmatprep.subr.bf16.mxu0 0
    %1842 = vmatpush1.bf16.msra.mxu0 %v1823
    %1843 = vmatprep.subr.bf16.mxu0 0
    %1844 = vmatpush1.bf16.msra.mxu0 %v1824
    %1845 = vmatprep.subr.bf16.mxu0 0
    %1846 = vmatpush1.bf16.msra.mxu0 %v1825
    %1847 = vmatprep.subr.bf16.mxu0 0
    %1848 = vmatpush1.bf16.msra.mxu0 %v1826
    %1849 = vmatprep.subr.bf16.mxu0 0
    %1850 = vmatpush1.bf16.msra.mxu0 %v1827
    %1851 = vmatprep.subr.bf16.mxu0 0
    %1852 = vmatpush1.bf16.msra.mxu0 %v1828
    %1853 = vmatprep.subr.bf16.mxu0 0
    %1854 = vmatpush1.bf16.msra.mxu0 0
    %1855 = vmatprep.subr.bf16.mxu0 0
    %1856 = vmatpush1.bf16.msra.mxu0 0
    %1857 = vmatprep.subr.bf16.mxu0 0
    %1858 = vmatpush1.bf16.msra.mxu0 0
    %1859 = vmatprep.subr.bf16.mxu0 0
    %1860 = vmatpush1.bf16.msra.mxu0 0
    %1861 = vmatprep.subr.bf16.mxu0 0
    %1862 = vmatpush1.bf16.msra.mxu0 0
    %1863 = vmatprep.subr.bf16.mxu0 0
    %1864 = vmatpush1.bf16.msra.mxu0 0
    %1865 = vmatprep.subr.bf16.mxu0 0
    %1866 = vmatpush1.bf16.msra.mxu0 0
    %1867 = vmatprep.subr.bf16.mxu0 0
    %1868 = vmatpush1.bf16.msra.mxu0 0
    %1869 = vmatprep.mubr.bf16.mxu0 0
    %1870 = vmatmul.mubr.bf16.gmra.mrb[0].mxu0 %v1765
    %v1871 = vpop.f32.mrb[0].mxu0
    %v1872 = vadd.f32 %v1787, %v1871
    %v1873 = vpop.f32.mrb[0].mxu0
    %v1874 = vpop.f32.mrb[0].mxu0
    %v1875 = vpop.f32.mrb[0].mxu0
    %1876 = vdwg.mxu0
    %1877 = vmax.xlane.f32.xlu0 %v1872
    %v1878 = vpop.xlane.xlu0 %1877
    %v1879 = vsub.f32 %v1872, %v1878
    %v1880 = vmul.f32 %v1879, 1.442695
    %v1881 = vpow.pop %v1880
    %1882 = vadd.xlane.f32.xlu0 %v1881
    %v1883 = vpop.xlane.xlu0 %1882
    %v1884 = vrcp.pop %v1883
    %v1885 = vmul.f32 %v1881, %v1884
    %1886 = vst [vmem:[#allocation2] sm:$0xff] %v1885
    // Predicated region
    $region46: #{qnetwork_forward.1} parent=1 // pred_check
      _
    $region47: #{qnetwork_forward.1} parent=1 // pred_check_branch
      %1888 = sbr.rel (0) target = $region49
    $region48: #{qnetwork_forward.1} parent=1 // pred_region
      %s1890 = ssub.s32 128, 128
      %1891 = vsyncadd [#allocation3], %s1890
      %s1893 = sshll.u32 [#allocation2], 4
      %s1894 = int_to_ptr.vmem [resolvable:$true] %s1893
      %1896 = dma.vmem_to_hbm [thread:$0]  %s1894, 128, %s11, [#allocation3]
    $region49: #{qnetwork_forward.1} parent=1 // pred_fallthru
      _
    // Predicated region
    $region50: #{qnetwork_forward.1} parent=1 // pred_check
      _
    $region51: #{qnetwork_forward.1} parent=1 // pred_check_branch
      %1898 = sbr.rel (0) target = $region53
    $region52: #{qnetwork_forward.1} parent=1 // pred_region
      %1899 = dma.done [#allocation3], 128
    $region53: #{qnetwork_forward.1} parent=1 // pred_fallthru
      _
    %1900 = vsyncpa [#allocation3], 1

</llo_original>
